<compile_context>
chip_gen: v6e
topology: v6e:2x2x1
jax: 0.10.0
libtpu: 0.0.40
codegen_flags: <defaults>
</compile_context>

<pallas_src>
import jax
import jax.numpy as jnp
from jax import lax
from jax.experimental import pallas as pl
from jax.experimental.pallas import tpu as pltpu

# ---- hp stand-ins (small, deterministic) ------------------------------------
NUM_CLASSES = 32         # hp.num_classes (vocab size)
H           = 16         # hp.num_baseline_nodes
NUM_EMOTION = 4          # hp.num_emotion
EMB         = 300        # nn.Embedding(num_classes, 300)
B           = 2
T           = 8
DENSE_OUT   = H * 2 * 2  # = 64, matches original `dense` out_features


# =============================================================================
# Kernel
# =============================================================================
def text_based_kernel(idx_ref, idxr_ref, mask_ref,
                      m2_ref, whh0_ref, w4_ref, b1_ref, whh1_ref,
                      wd_ref, bd_ref, wo_ref, bo_ref,
                      out_ref):
    TB = idx_ref.shape[0]           # T * B (step-major flattened rows)
    Bn = out_ref.shape[0]           # batch
    Tn = TB // Bn                   # time steps
    G8 = m2_ref.shape[1]            # 8H (combined fwd+rev gates)
    H2 = G8 // 4                    # 2H
    Hn = H2 // 2                    # H
    V2 = m2_ref.shape[0]            # 2 * vocab

    mask = mask_ref[...]            # (TB, 2H) float: col[:H]=valid(t), col[H:]=valid(T-1-t)
    whh0 = whh0_ref[...]            # (2H, 8H) block-diagonal (fwd|rev)
    whh1 = whh1_ref[...]            # (2H, 8H) block-diagonal (fwd|rev)

    # ---- Layer 0: embedding + Wih + bias + fwd/rev blend in ONE matmul -------
    # two-hot row s*B+b has a 1 at x[b, s] (first half) and at V + x[b, T-1-s]
    # (second half); m2 = [m0 * fwd_cols ; m0 * rev_cols] with m0 = emb@Wih + b.
    iota = lax.broadcasted_iota(jnp.int32, (TB, V2), 1)
    twohot = jnp.logical_or(iota == idx_ref[...],
                            iota == idxr_ref[...]).astype(jnp.float32)      # (TB, 2V)
    pre0 = jnp.dot(twohot, m2_ref[...],
                   preferred_element_type=jnp.float32)                      # (TB, 8H)

    def bilstm(pre_all, whh):
        """Merged fwd+rev LSTM recurrence, fully unrolled over time.

        pre_all : (TB, 8H) blended gate pre-activation; row s*B+b already holds
                  fwd input @ time s in the fwd gate columns and rev input @
                  time T-1-s in the rev gate columns.
        whh     : (2H, 8H) block-diagonal hidden-to-gate weights.
        Returns a list of (B, 2H) masked outputs; element s holds fwd time s in
        cols [:H] and rev time T-1-s in cols [H:].
        """
        h = jnp.zeros((Bn, H2), jnp.float32)    # [h_fwd | h_rev]
        c = jnp.zeros((Bn, H2), jnp.float32)    # [c_fwd | c_rev]
        outs = []
        for s in range(Tn):
            r = s * Bn
            pre = pre_all[r:r + Bn, :]          # (B, 8H) static slice, off-chain
            m = mask[r:r + Bn, :] > 0.0         # (B, 2H) bool, off-chain

            gates = pre + jnp.dot(h, whh, preferred_element_type=jnp.float32)
            sig = jax.nn.sigmoid(gates)         # one full-width EUP pass
            i = sig[:, 0 * H2:1 * H2]           # [i_f | i_r]
            f = sig[:, 1 * H2:2 * H2]           # [f_f | f_r]
            o = sig[:, 2 * H2:3 * H2]           # [o_f | o_r]
            g = jnp.tanh(gates[:, 3 * H2:4 * H2])

            c_new = f * c + i * g
            h_new = o * jnp.tanh(c_new)
            # pack_padded emulation: hold state at padded positions (single selects).
            c = jnp.where(m, c_new, c)
            h = jnp.where(m, h_new, h)
            outs.append(jnp.where(m, h_new, 0.0))   # padded positions -> zeros
        return outs

    # ---- Layer 1 (bidirectional): outputs stay in registers ------------------
    outs1 = bilstm(pre0, whh0)
    X  = jnp.concatenate(outs1, axis=0)          # (TB, 2H)  step-major
    Xr = jnp.concatenate(outs1[::-1], axis=0)    # (TB, 2H)  time-reversed (free: just order)
    XX = jnp.concatenate([X, Xr], axis=1)        # (TB, 4H)

    # ---- Layer 2 input projection + fwd/rev blend in ONE matmul --------------
    pre1 = jnp.dot(XX, w4_ref[...],
                   preferred_element_type=jnp.float32) + b1_ref[...]        # (TB, 8H)

    outs2 = bilstm(pre1, whh1)

    # ---- hbatch.mean(dim=1): padded positions are zero, denominator is T -----
    acc = outs2[0]
    for s in range(1, Tn):
        acc = acc + outs2[s]                     # order over time irrelevant for the sum
    maxp = acc * (1.0 / Tn)                      # (B, 2H)

    # ---- dense -> ReLU -> output ----------------------------------------------
    res = jnp.maximum(
        jnp.dot(maxp, wd_ref[...], preferred_element_type=jnp.float32) + bd_ref[...],
        0.0)
    out_ref[...] = jnp.dot(res, wo_ref[...],
                           preferred_element_type=jnp.float32) + bo_ref[...]
    del Hn  # (layout bookkeeping only)


# =============================================================================
# One-time parameter repacking (hoisted out of the per-call jit path)
# =============================================================================
def _gate_rows(w):
    """PyTorch packs LSTM gates as rows [i, f, g, o]; reorder to [i, f, o, g]."""
    return (w[0 * H:1 * H], w[1 * H:2 * H], w[3 * H:4 * H], w[2 * H:3 * H])


def _combine_ih(wf, wr):
    """(4H, in) fwd/rev -> (in, 8H), gate blocks [i_f,i_r,f_f,f_r,o_f,o_r,g_f,g_r]."""
    cols = []
    for gf, gr in zip(_gate_rows(wf), _gate_rows(wr)):
        cols.append(gf.T)
        cols.append(gr.T)
    return jnp.concatenate(cols, axis=1)


def _combine_hh(wf, wr):
    """(4H, H) fwd/rev -> block-diagonal (2H, 8H): h_fwd drives fwd cols only."""
    z = jnp.zeros((H, H), jnp.float32)
    cols = []
    for gf, gr in zip(_gate_rows(wf), _gate_rows(wr)):
        cols.append(jnp.concatenate([gf.T, z], axis=0))
        cols.append(jnp.concatenate([z, gr.T], axis=0))
    return jnp.concatenate(cols, axis=1)


def _combine_bias(bif, bhf, bir, bhr):
    """Fold b_ih+b_hh per direction -> (1, 8H) in the combined gate layout."""
    bf = (bif + bhf).reshape(4 * H, 1)
    br = (bir + bhr).reshape(4 * H, 1)
    segs = []
    for gf, gr in zip(_gate_rows(bf), _gate_rows(br)):
        segs.append(gf.reshape(1, H))
        segs.append(gr.reshape(1, H))
    return jnp.concatenate(segs, axis=1)


def prepare_params(p):
    """Pack PyTorch-style LSTM/linear params into the fused kernel layouts. Run ONCE."""
    colf8 = jnp.tile((jnp.arange(2 * H) < H).astype(jnp.float32), (4,))[None, :]  # (1, 8H)
    inv8 = 1.0 - colf8

    # Layer 0: fuse embedding with input projection (+ folded bias), then split
    # into fwd-column / rev-column halves for the two-hot pick.
    wih0c = _combine_ih(p['w_ih_l0'], p['w_ih_l0r'])
    b0 = _combine_bias(p['b_ih_l0'], p['b_hh_l0'], p['b_ih_l0r'], p['b_hh_l0r'])
    m0 = jnp.dot(p['emb'], wih0c) + b0                        # (V, 8H)
    m2 = jnp.concatenate([m0 * colf8, m0 * inv8], axis=0)     # (2V, 8H)
    whh0 = _combine_hh(p['w_hh_l0'], p['w_hh_l0r'])

    # Layer 1: column-masked 4H-row input-projection for the blended XX matmul.
    wih1c = _combine_ih(p['w_ih_l1'], p['w_ih_l1r'])          # (2H, 8H)
    b1 = _combine_bias(p['b_ih_l1'], p['b_hh_l1'], p['b_ih_l1r'], p['b_hh_l1r'])
    w4 = jnp.concatenate([wih1c[:H] * colf8,
                          wih1c[H:] * inv8,
                          wih1c[:H] * inv8,
                          wih1c[H:] * colf8], axis=0)         # (4H, 8H)
    whh1 = _combine_hh(p['w_hh_l1'], p['w_hh_l1r'])

    return dict(m2=m2, whh0=whh0, w4=w4, b1=b1, whh1=whh1,
                wd=p['wd'], bd=p['bd'], wo=p['wo'], bo=p['bo'])


# =============================================================================
# Per-call forward: index/mask prep + one pallas_call
# =============================================================================
@jax.jit
def text_based_forward(x, lengths, packed):
    Bn, Tn = x.shape

    # Time-major flattened token ids (row = t*B + b) and their time-reverse,
    # pre-shifted by V for the second half of the two-hot.
    idx = x.T.reshape(Tn * Bn, 1).astype(jnp.int32)
    idxr = x[:, ::-1].T.reshape(Tn * Bn, 1).astype(jnp.int32) + NUM_CLASSES

    # Validity mask, already blended per step: cols [:H] = (t < len),
    # cols [H:] = (T-1-t < len), row = t*B + b.
    ts = jnp.arange(Tn, dtype=jnp.int32)
    lens = lengths.astype(jnp.int32)
    mf = (ts[:, None] < lens[None, :]).astype(jnp.float32)                 # (T, B)
    mr = ((Tn - 1 - ts)[:, None] < lens[None, :]).astype(jnp.float32)      # (T, B)
    mask_all = jnp.repeat(jnp.stack([mf, mr], axis=-1), H,
                          axis=-1).reshape(Tn * Bn, 2 * H)                 # (TB, 2H)

    args = (idx, idxr, mask_all,
            packed['m2'], packed['whh0'], packed['w4'], packed['b1'], packed['whh1'],
            packed['wd'], packed['bd'], packed['wo'], packed['bo'])
    return pl.pallas_call(
        text_based_kernel,
        out_shape=jax.ShapeDtypeStruct((Bn, NUM_EMOTION), jnp.float32),
        in_specs=[pl.BlockSpec(memory_space=pltpu.MemorySpace.VMEM)] * len(args),
        out_specs=pl.BlockSpec(memory_space=pltpu.MemorySpace.VMEM),
    )(*args)


# =============================================================================
# PyTorch-style parameter init
# =============================================================================
def init_params(key):
    ks = iter(jax.random.split(key, 32))
    s = 1.0 / (H ** 0.5)

    def u(shape):
        return jax.random.uniform(next(ks), shape, jnp.float32, -s, s)

    p = {'emb': jax.random.normal(next(ks), (NUM_CLASSES, EMB), jnp.float32)}
    for layer, in_dim in ((0, EMB), (1, 2 * H)):
        for suf in ('', 'r'):                      # forward / reverse direction
            p[f'w_ih_l{layer}{suf}'] = u((4 * H, in_dim))
            p[f'w_hh_l{layer}{suf}'] = u((4 * H, H))
            p[f'b_ih_l{layer}{suf}'] = u((4 * H,))
            p[f'b_hh_l{layer}{suf}'] = u((4 * H,))
    # dense (in adjusted to 2H for the mean path, see TODO) and output head
    p['wd'], p['bd'] = u((2 * H, DENSE_OUT)), u((1, DENSE_OUT))
    p['wo'], p['bo'] = u((DENSE_OUT, NUM_EMOTION)), u((1, NUM_EMOTION))
    return p


if __name__ == "__main__":
    key = jax.random.PRNGKey(0)
    pkey, ikey = jax.random.split(key)
    params = init_params(pkey)
    packed = prepare_params(params)                # one-time repacking (outside jit)

    x = jax.random.randint(ikey, (B, T), 0, NUM_CLASSES, dtype=jnp.int32)
    lengths = jnp.array([T, 5], dtype=jnp.int32)   # sorted descending (pack_padded default)

    emotion = text_based_forward(x, lengths, packed)
    emotion = jax.block_until_ready(emotion)
    assert emotion.shape == (B, NUM_EMOTION) and emotion.dtype == jnp.float32
    print("KERNEL_OK")
</pallas_src>

<mosaic_0001>
module attributes {stable_mosaic.version = 11 : i64} {
  func.func @text_based_kernel(%arg0: memref<16x1xi32, #tpu.memory_space<vmem>>, %arg1: memref<16x1xi32, #tpu.memory_space<vmem>>, %arg2: memref<16x32xf32, #tpu.memory_space<vmem>>, %arg3: memref<64x128xf32, #tpu.memory_space<vmem>>, %arg4: memref<32x128xf32, #tpu.memory_space<vmem>>, %arg5: memref<64x128xf32, #tpu.memory_space<vmem>>, %arg6: memref<1x128xf32, #tpu.memory_space<vmem>>, %arg7: memref<32x128xf32, #tpu.memory_space<vmem>>, %arg8: memref<32x64xf32, #tpu.memory_space<vmem>>, %arg9: memref<1x64xf32, #tpu.memory_space<vmem>>, %arg10: memref<64x4xf32, #tpu.memory_space<vmem>>, %arg11: memref<1x4xf32, #tpu.memory_space<vmem>>, %arg12: memref<2x4xf32, #tpu.memory_space<vmem>>) attributes {dimension_semantics = [], scalar_prefetch = 0 : i64, scratch_operands = 0 : i64, tpu.core_type = #tpu.core_type<tc>} {
    %c0 = arith.constant 0 : index
    %c0_0 = arith.constant 0 : index
    %0 = vector.load %arg2[%c0, %c0_0] : memref<16x32xf32, #tpu.memory_space<vmem>>, vector<16x32xf32>
    %c0_1 = arith.constant 0 : index
    %c0_2 = arith.constant 0 : index
    %1 = vector.load %arg4[%c0_1, %c0_2] : memref<32x128xf32, #tpu.memory_space<vmem>>, vector<32x128xf32>
    %c0_3 = arith.constant 0 : index
    %c0_4 = arith.constant 0 : index
    %2 = vector.load %arg7[%c0_3, %c0_4] : memref<32x128xf32, #tpu.memory_space<vmem>>, vector<32x128xf32>
    %3 = tpu.iota {dimensions = array<i32: 1>} : vector<16x64xi32>
    %c0_5 = arith.constant 0 : index
    %c0_6 = arith.constant 0 : index
    %4 = vector.load %arg0[%c0_5, %c0_6] : memref<16x1xi32, #tpu.memory_space<vmem>>, vector<16x1xi32>
    %5 = vector.broadcast %4 : vector<16x1xi32> to vector<16x64xi32>
    %6 = arith.cmpi eq, %3, %5 : vector<16x64xi32>
    %c0_7 = arith.constant 0 : index
    %c0_8 = arith.constant 0 : index
    %7 = vector.load %arg1[%c0_7, %c0_8] : memref<16x1xi32, #tpu.memory_space<vmem>>, vector<16x1xi32>
    %8 = vector.broadcast %7 : vector<16x1xi32> to vector<16x64xi32>
    %9 = arith.cmpi eq, %3, %8 : vector<16x64xi32>
    %10 = arith.ori %6, %9 : vector<16x64xi1>
    %11 = arith.extui %10 : vector<16x64xi1> to vector<16x64xi32>
    %12 = arith.sitofp %11 : vector<16x64xi32> to vector<16x64xf32>
    %c0_9 = arith.constant 0 : index
    %c0_10 = arith.constant 0 : index
    %13 = vector.load %arg3[%c0_9, %c0_10] : memref<64x128xf32, #tpu.memory_space<vmem>>, vector<64x128xf32>
    %cst = arith.constant dense<0.000000e+00> : vector<16x128xf32>
    %14 = tpu.matmul %12, %13, %cst {dimension_numbers = #tpu.dot_dimension_numbers<[1], [0], [0], [1], [0, 0, 1, 1], [], []>} : vector<16x64xf32>, vector<64x128xf32>, vector<16x128xf32> -> vector<16x128xf32>
    %cst_11 = arith.constant 0.000000e+00 : f32
    %15 = vector.broadcast %cst_11 : f32 to vector<2x32xf32>
    %cst_12 = arith.constant 0.000000e+00 : f32
    %16 = vector.broadcast %cst_12 : f32 to vector<2x32xf32>
    %17 = vector.extract_strided_slice %14 {offsets = [0, 0], sizes = [2, 128], strides = [1, 1]} : vector<16x128xf32> to vector<2x128xf32>
    %18 = vector.extract_strided_slice %0 {offsets = [0, 0], sizes = [2, 32], strides = [1, 1]} : vector<16x32xf32> to vector<2x32xf32>
    %cst_13 = arith.constant 0.000000e+00 : f32
    %19 = vector.broadcast %cst_13 : f32 to vector<2x32xf32>
    %20 = arith.cmpf ogt, %18, %19 : vector<2x32xf32>
    %cst_14 = arith.constant dense<0.000000e+00> : vector<2x128xf32>
    %21 = tpu.matmul %15, %1, %cst_14 {dimension_numbers = #tpu.dot_dimension_numbers<[1], [0], [0], [1], [0, 0, 1, 1], [], []>} : vector<2x32xf32>, vector<32x128xf32>, vector<2x128xf32> -> vector<2x128xf32>
    %22 = arith.addf %17, %21 : vector<2x128xf32>
    %23 = arith.negf %22 : vector<2x128xf32>
    %24 = math.exp %23 : vector<2x128xf32>
    %cst_15 = arith.constant 1.000000e+00 : f32
    %25 = vector.broadcast %cst_15 : f32 to vector<2x128xf32>
    %26 = arith.addf %25, %24 : vector<2x128xf32>
    %27 = arith.divf %25, %26 : vector<2x128xf32>
    %28 = vector.extract_strided_slice %27 {offsets = [0, 0], sizes = [2, 32], strides = [1, 1]} : vector<2x128xf32> to vector<2x32xf32>
    %29 = vector.extract_strided_slice %27 {offsets = [0, 32], sizes = [2, 32], strides = [1, 1]} : vector<2x128xf32> to vector<2x32xf32>
    %30 = vector.extract_strided_slice %27 {offsets = [0, 64], sizes = [2, 32], strides = [1, 1]} : vector<2x128xf32> to vector<2x32xf32>
    %31 = vector.extract_strided_slice %22 {offsets = [0, 96], sizes = [2, 32], strides = [1, 1]} : vector<2x128xf32> to vector<2x32xf32>
    %32 = math.tanh %31 : vector<2x32xf32>
    %33 = arith.mulf %29, %16 : vector<2x32xf32>
    %34 = arith.mulf %28, %32 : vector<2x32xf32>
    %35 = arith.addf %33, %34 : vector<2x32xf32>
    %36 = math.tanh %35 : vector<2x32xf32>
    %37 = arith.mulf %30, %36 : vector<2x32xf32>
    %38 = arith.select %20, %35, %16 : vector<2x32xi1>, vector<2x32xf32>
    %39 = arith.select %20, %37, %15 : vector<2x32xi1>, vector<2x32xf32>
    %cst_16 = arith.constant 0.000000e+00 : f32
    %40 = vector.broadcast %cst_16 : f32 to vector<2x32xf32>
    %41 = arith.select %20, %37, %40 : vector<2x32xi1>, vector<2x32xf32>
    %42 = vector.extract_strided_slice %14 {offsets = [2, 0], sizes = [2, 128], strides = [1, 1]} : vector<16x128xf32> to vector<2x128xf32>
    %43 = vector.extract_strided_slice %0 {offsets = [2, 0], sizes = [2, 32], strides = [1, 1]} : vector<16x32xf32> to vector<2x32xf32>
    %cst_17 = arith.constant 0.000000e+00 : f32
    %44 = vector.broadcast %cst_17 : f32 to vector<2x32xf32>
    %45 = arith.cmpf ogt, %43, %44 : vector<2x32xf32>
    %cst_18 = arith.constant dense<0.000000e+00> : vector<2x128xf32>
    %46 = tpu.matmul %39, %1, %cst_18 {dimension_numbers = #tpu.dot_dimension_numbers<[1], [0], [0], [1], [0, 0, 1, 1], [], []>} : vector<2x32xf32>, vector<32x128xf32>, vector<2x128xf32> -> vector<2x128xf32>
    %47 = arith.addf %42, %46 : vector<2x128xf32>
    %48 = arith.negf %47 : vector<2x128xf32>
    %49 = math.exp %48 : vector<2x128xf32>
    %cst_19 = arith.constant 1.000000e+00 : f32
    %50 = vector.broadcast %cst_19 : f32 to vector<2x128xf32>
    %51 = arith.addf %50, %49 : vector<2x128xf32>
    %52 = arith.divf %50, %51 : vector<2x128xf32>
    %53 = vector.extract_strided_slice %52 {offsets = [0, 0], sizes = [2, 32], strides = [1, 1]} : vector<2x128xf32> to vector<2x32xf32>
    %54 = vector.extract_strided_slice %52 {offsets = [0, 32], sizes = [2, 32], strides = [1, 1]} : vector<2x128xf32> to vector<2x32xf32>
    %55 = vector.extract_strided_slice %52 {offsets = [0, 64], sizes = [2, 32], strides = [1, 1]} : vector<2x128xf32> to vector<2x32xf32>
    %56 = vector.extract_strided_slice %47 {offsets = [0, 96], sizes = [2, 32], strides = [1, 1]} : vector<2x128xf32> to vector<2x32xf32>
    %57 = math.tanh %56 : vector<2x32xf32>
    %58 = arith.mulf %54, %38 : vector<2x32xf32>
    %59 = arith.mulf %53, %57 : vector<2x32xf32>
    %60 = arith.addf %58, %59 : vector<2x32xf32>
    %61 = math.tanh %60 : vector<2x32xf32>
    %62 = arith.mulf %55, %61 : vector<2x32xf32>
    %63 = arith.select %45, %60, %38 : vector<2x32xi1>, vector<2x32xf32>
    %64 = arith.select %45, %62, %39 : vector<2x32xi1>, vector<2x32xf32>
    %cst_20 = arith.constant 0.000000e+00 : f32
    %65 = vector.broadcast %cst_20 : f32 to vector<2x32xf32>
    %66 = arith.select %45, %62, %65 : vector<2x32xi1>, vector<2x32xf32>
    %67 = vector.extract_strided_slice %14 {offsets = [4, 0], sizes = [2, 128], strides = [1, 1]} : vector<16x128xf32> to vector<2x128xf32>
    %68 = vector.extract_strided_slice %0 {offsets = [4, 0], sizes = [2, 32], strides = [1, 1]} : vector<16x32xf32> to vector<2x32xf32>
    %cst_21 = arith.constant 0.000000e+00 : f32
    %69 = vector.broadcast %cst_21 : f32 to vector<2x32xf32>
    %70 = arith.cmpf ogt, %68, %69 : vector<2x32xf32>
    %cst_22 = arith.constant dense<0.000000e+00> : vector<2x128xf32>
    %71 = tpu.matmul %64, %1, %cst_22 {dimension_numbers = #tpu.dot_dimension_numbers<[1], [0], [0], [1], [0, 0, 1, 1], [], []>} : vector<2x32xf32>, vector<32x128xf32>, vector<2x128xf32> -> vector<2x128xf32>
    %72 = arith.addf %67, %71 : vector<2x128xf32>
    %73 = arith.negf %72 : vector<2x128xf32>
    %74 = math.exp %73 : vector<2x128xf32>
    %cst_23 = arith.constant 1.000000e+00 : f32
    %75 = vector.broadcast %cst_23 : f32 to vector<2x128xf32>
    %76 = arith.addf %75, %74 : vector<2x128xf32>
    %77 = arith.divf %75, %76 : vector<2x128xf32>
    %78 = vector.extract_strided_slice %77 {offsets = [0, 0], sizes = [2, 32], strides = [1, 1]} : vector<2x128xf32> to vector<2x32xf32>
    %79 = vector.extract_strided_slice %77 {offsets = [0, 32], sizes = [2, 32], strides = [1, 1]} : vector<2x128xf32> to vector<2x32xf32>
    %80 = vector.extract_strided_slice %77 {offsets = [0, 64], sizes = [2, 32], strides = [1, 1]} : vector<2x128xf32> to vector<2x32xf32>
    %81 = vector.extract_strided_slice %72 {offsets = [0, 96], sizes = [2, 32], strides = [1, 1]} : vector<2x128xf32> to vector<2x32xf32>
    %82 = math.tanh %81 : vector<2x32xf32>
    %83 = arith.mulf %79, %63 : vector<2x32xf32>
    %84 = arith.mulf %78, %82 : vector<2x32xf32>
    %85 = arith.addf %83, %84 : vector<2x32xf32>
    %86 = math.tanh %85 : vector<2x32xf32>
    %87 = arith.mulf %80, %86 : vector<2x32xf32>
    %88 = arith.select %70, %85, %63 : vector<2x32xi1>, vector<2x32xf32>
    %89 = arith.select %70, %87, %64 : vector<2x32xi1>, vector<2x32xf32>
    %cst_24 = arith.constant 0.000000e+00 : f32
    %90 = vector.broadcast %cst_24 : f32 to vector<2x32xf32>
    %91 = arith.select %70, %87, %90 : vector<2x32xi1>, vector<2x32xf32>
    %92 = vector.extract_strided_slice %14 {offsets = [6, 0], sizes = [2, 128], strides = [1, 1]} : vector<16x128xf32> to vector<2x128xf32>
    %93 = vector.extract_strided_slice %0 {offsets = [6, 0], sizes = [2, 32], strides = [1, 1]} : vector<16x32xf32> to vector<2x32xf32>
    %cst_25 = arith.constant 0.000000e+00 : f32
    %94 = vector.broadcast %cst_25 : f32 to vector<2x32xf32>
    %95 = arith.cmpf ogt, %93, %94 : vector<2x32xf32>
    %cst_26 = arith.constant dense<0.000000e+00> : vector<2x128xf32>
    %96 = tpu.matmul %89, %1, %cst_26 {dimension_numbers = #tpu.dot_dimension_numbers<[1], [0], [0], [1], [0, 0, 1, 1], [], []>} : vector<2x32xf32>, vector<32x128xf32>, vector<2x128xf32> -> vector<2x128xf32>
    %97 = arith.addf %92, %96 : vector<2x128xf32>
    %98 = arith.negf %97 : vector<2x128xf32>
    %99 = math.exp %98 : vector<2x128xf32>
    %cst_27 = arith.constant 1.000000e+00 : f32
    %100 = vector.broadcast %cst_27 : f32 to vector<2x128xf32>
    %101 = arith.addf %100, %99 : vector<2x128xf32>
    %102 = arith.divf %100, %101 : vector<2x128xf32>
    %103 = vector.extract_strided_slice %102 {offsets = [0, 0], sizes = [2, 32], strides = [1, 1]} : vector<2x128xf32> to vector<2x32xf32>
    %104 = vector.extract_strided_slice %102 {offsets = [0, 32], sizes = [2, 32], strides = [1, 1]} : vector<2x128xf32> to vector<2x32xf32>
    %105 = vector.extract_strided_slice %102 {offsets = [0, 64], sizes = [2, 32], strides = [1, 1]} : vector<2x128xf32> to vector<2x32xf32>
    %106 = vector.extract_strided_slice %97 {offsets = [0, 96], sizes = [2, 32], strides = [1, 1]} : vector<2x128xf32> to vector<2x32xf32>
    %107 = math.tanh %106 : vector<2x32xf32>
    %108 = arith.mulf %104, %88 : vector<2x32xf32>
    %109 = arith.mulf %103, %107 : vector<2x32xf32>
    %110 = arith.addf %108, %109 : vector<2x32xf32>
    %111 = math.tanh %110 : vector<2x32xf32>
    %112 = arith.mulf %105, %111 : vector<2x32xf32>
    %113 = arith.select %95, %110, %88 : vector<2x32xi1>, vector<2x32xf32>
    %114 = arith.select %95, %112, %89 : vector<2x32xi1>, vector<2x32xf32>
    %cst_28 = arith.constant 0.000000e+00 : f32
    %115 = vector.broadcast %cst_28 : f32 to vector<2x32xf32>
    %116 = arith.select %95, %112, %115 : vector<2x32xi1>, vector<2x32xf32>
    %117 = vector.extract_strided_slice %14 {offsets = [8, 0], sizes = [2, 128], strides = [1, 1]} : vector<16x128xf32> to vector<2x128xf32>
    %118 = vector.extract_strided_slice %0 {offsets = [8, 0], sizes = [2, 32], strides = [1, 1]} : vector<16x32xf32> to vector<2x32xf32>
    %cst_29 = arith.constant 0.000000e+00 : f32
    %119 = vector.broadcast %cst_29 : f32 to vector<2x32xf32>
    %120 = arith.cmpf ogt, %118, %119 : vector<2x32xf32>
    %cst_30 = arith.constant dense<0.000000e+00> : vector<2x128xf32>
    %121 = tpu.matmul %114, %1, %cst_30 {dimension_numbers = #tpu.dot_dimension_numbers<[1], [0], [0], [1], [0, 0, 1, 1], [], []>} : vector<2x32xf32>, vector<32x128xf32>, vector<2x128xf32> -> vector<2x128xf32>
    %122 = arith.addf %117, %121 : vector<2x128xf32>
    %123 = arith.negf %122 : vector<2x128xf32>
    %124 = math.exp %123 : vector<2x128xf32>
    %cst_31 = arith.constant 1.000000e+00 : f32
    %125 = vector.broadcast %cst_31 : f32 to vector<2x128xf32>
    %126 = arith.addf %125, %124 : vector<2x128xf32>
    %127 = arith.divf %125, %126 : vector<2x128xf32>
    %128 = vector.extract_strided_slice %127 {offsets = [0, 0], sizes = [2, 32], strides = [1, 1]} : vector<2x128xf32> to vector<2x32xf32>
    %129 = vector.extract_strided_slice %127 {offsets = [0, 32], sizes = [2, 32], strides = [1, 1]} : vector<2x128xf32> to vector<2x32xf32>
    %130 = vector.extract_strided_slice %127 {offsets = [0, 64], sizes = [2, 32], strides = [1, 1]} : vector<2x128xf32> to vector<2x32xf32>
    %131 = vector.extract_strided_slice %122 {offsets = [0, 96], sizes = [2, 32], strides = [1, 1]} : vector<2x128xf32> to vector<2x32xf32>
    %132 = math.tanh %131 : vector<2x32xf32>
    %133 = arith.mulf %129, %113 : vector<2x32xf32>
    %134 = arith.mulf %128, %132 : vector<2x32xf32>
    %135 = arith.addf %133, %134 : vector<2x32xf32>
    %136 = math.tanh %135 : vector<2x32xf32>
    %137 = arith.mulf %130, %136 : vector<2x32xf32>
    %138 = arith.select %120, %135, %113 : vector<2x32xi1>, vector<2x32xf32>
    %139 = arith.select %120, %137, %114 : vector<2x32xi1>, vector<2x32xf32>
    %cst_32 = arith.constant 0.000000e+00 : f32
    %140 = vector.broadcast %cst_32 : f32 to vector<2x32xf32>
    %141 = arith.select %120, %137, %140 : vector<2x32xi1>, vector<2x32xf32>
    %142 = vector.extract_strided_slice %14 {offsets = [10, 0], sizes = [2, 128], strides = [1, 1]} : vector<16x128xf32> to vector<2x128xf32>
    %143 = vector.extract_strided_slice %0 {offsets = [10, 0], sizes = [2, 32], strides = [1, 1]} : vector<16x32xf32> to vector<2x32xf32>
    %cst_33 = arith.constant 0.000000e+00 : f32
    %144 = vector.broadcast %cst_33 : f32 to vector<2x32xf32>
    %145 = arith.cmpf ogt, %143, %144 : vector<2x32xf32>
    %cst_34 = arith.constant dense<0.000000e+00> : vector<2x128xf32>
    %146 = tpu.matmul %139, %1, %cst_34 {dimension_numbers = #tpu.dot_dimension_numbers<[1], [0], [0], [1], [0, 0, 1, 1], [], []>} : vector<2x32xf32>, vector<32x128xf32>, vector<2x128xf32> -> vector<2x128xf32>
    %147 = arith.addf %142, %146 : vector<2x128xf32>
    %148 = arith.negf %147 : vector<2x128xf32>
    %149 = math.exp %148 : vector<2x128xf32>
    %cst_35 = arith.constant 1.000000e+00 : f32
    %150 = vector.broadcast %cst_35 : f32 to vector<2x128xf32>
    %151 = arith.addf %150, %149 : vector<2x128xf32>
    %152 = arith.divf %150, %151 : vector<2x128xf32>
    %153 = vector.extract_strided_slice %152 {offsets = [0, 0], sizes = [2, 32], strides = [1, 1]} : vector<2x128xf32> to vector<2x32xf32>
    %154 = vector.extract_strided_slice %152 {offsets = [0, 32], sizes = [2, 32], strides = [1, 1]} : vector<2x128xf32> to vector<2x32xf32>
    %155 = vector.extract_strided_slice %152 {offsets = [0, 64], sizes = [2, 32], strides = [1, 1]} : vector<2x128xf32> to vector<2x32xf32>
    %156 = vector.extract_strided_slice %147 {offsets = [0, 96], sizes = [2, 32], strides = [1, 1]} : vector<2x128xf32> to vector<2x32xf32>
    %157 = math.tanh %156 : vector<2x32xf32>
    %158 = arith.mulf %154, %138 : vector<2x32xf32>
    %159 = arith.mulf %153, %157 : vector<2x32xf32>
    %160 = arith.addf %158, %159 : vector<2x32xf32>
    %161 = math.tanh %160 : vector<2x32xf32>
    %162 = arith.mulf %155, %161 : vector<2x32xf32>
    %163 = arith.select %145, %160, %138 : vector<2x32xi1>, vector<2x32xf32>
    %164 = arith.select %145, %162, %139 : vector<2x32xi1>, vector<2x32xf32>
    %cst_36 = arith.constant 0.000000e+00 : f32
    %165 = vector.broadcast %cst_36 : f32 to vector<2x32xf32>
    %166 = arith.select %145, %162, %165 : vector<2x32xi1>, vector<2x32xf32>
    %167 = vector.extract_strided_slice %14 {offsets = [12, 0], sizes = [2, 128], strides = [1, 1]} : vector<16x128xf32> to vector<2x128xf32>
    %168 = vector.extract_strided_slice %0 {offsets = [12, 0], sizes = [2, 32], strides = [1, 1]} : vector<16x32xf32> to vector<2x32xf32>
    %cst_37 = arith.constant 0.000000e+00 : f32
    %169 = vector.broadcast %cst_37 : f32 to vector<2x32xf32>
    %170 = arith.cmpf ogt, %168, %169 : vector<2x32xf32>
    %cst_38 = arith.constant dense<0.000000e+00> : vector<2x128xf32>
    %171 = tpu.matmul %164, %1, %cst_38 {dimension_numbers = #tpu.dot_dimension_numbers<[1], [0], [0], [1], [0, 0, 1, 1], [], []>} : vector<2x32xf32>, vector<32x128xf32>, vector<2x128xf32> -> vector<2x128xf32>
    %172 = arith.addf %167, %171 : vector<2x128xf32>
    %173 = arith.negf %172 : vector<2x128xf32>
    %174 = math.exp %173 : vector<2x128xf32>
    %cst_39 = arith.constant 1.000000e+00 : f32
    %175 = vector.broadcast %cst_39 : f32 to vector<2x128xf32>
    %176 = arith.addf %175, %174 : vector<2x128xf32>
    %177 = arith.divf %175, %176 : vector<2x128xf32>
    %178 = vector.extract_strided_slice %177 {offsets = [0, 0], sizes = [2, 32], strides = [1, 1]} : vector<2x128xf32> to vector<2x32xf32>
    %179 = vector.extract_strided_slice %177 {offsets = [0, 32], sizes = [2, 32], strides = [1, 1]} : vector<2x128xf32> to vector<2x32xf32>
    %180 = vector.extract_strided_slice %177 {offsets = [0, 64], sizes = [2, 32], strides = [1, 1]} : vector<2x128xf32> to vector<2x32xf32>
    %181 = vector.extract_strided_slice %172 {offsets = [0, 96], sizes = [2, 32], strides = [1, 1]} : vector<2x128xf32> to vector<2x32xf32>
    %182 = math.tanh %181 : vector<2x32xf32>
    %183 = arith.mulf %179, %163 : vector<2x32xf32>
    %184 = arith.mulf %178, %182 : vector<2x32xf32>
    %185 = arith.addf %183, %184 : vector<2x32xf32>
    %186 = math.tanh %185 : vector<2x32xf32>
    %187 = arith.mulf %180, %186 : vector<2x32xf32>
    %188 = arith.select %170, %185, %163 : vector<2x32xi1>, vector<2x32xf32>
    %189 = arith.select %170, %187, %164 : vector<2x32xi1>, vector<2x32xf32>
    %cst_40 = arith.constant 0.000000e+00 : f32
    %190 = vector.broadcast %cst_40 : f32 to vector<2x32xf32>
    %191 = arith.select %170, %187, %190 : vector<2x32xi1>, vector<2x32xf32>
    %192 = vector.extract_strided_slice %14 {offsets = [14, 0], sizes = [2, 128], strides = [1, 1]} : vector<16x128xf32> to vector<2x128xf32>
    %193 = vector.extract_strided_slice %0 {offsets = [14, 0], sizes = [2, 32], strides = [1, 1]} : vector<16x32xf32> to vector<2x32xf32>
    %cst_41 = arith.constant 0.000000e+00 : f32
    %194 = vector.broadcast %cst_41 : f32 to vector<2x32xf32>
    %195 = arith.cmpf ogt, %193, %194 : vector<2x32xf32>
    %cst_42 = arith.constant dense<0.000000e+00> : vector<2x128xf32>
    %196 = tpu.matmul %189, %1, %cst_42 {dimension_numbers = #tpu.dot_dimension_numbers<[1], [0], [0], [1], [0, 0, 1, 1], [], []>} : vector<2x32xf32>, vector<32x128xf32>, vector<2x128xf32> -> vector<2x128xf32>
    %197 = arith.addf %192, %196 : vector<2x128xf32>
    %198 = arith.negf %197 : vector<2x128xf32>
    %199 = math.exp %198 : vector<2x128xf32>
    %cst_43 = arith.constant 1.000000e+00 : f32
    %200 = vector.broadcast %cst_43 : f32 to vector<2x128xf32>
    %201 = arith.addf %200, %199 : vector<2x128xf32>
    %202 = arith.divf %200, %201 : vector<2x128xf32>
    %203 = vector.extract_strided_slice %202 {offsets = [0, 0], sizes = [2, 32], strides = [1, 1]} : vector<2x128xf32> to vector<2x32xf32>
    %204 = vector.extract_strided_slice %202 {offsets = [0, 32], sizes = [2, 32], strides = [1, 1]} : vector<2x128xf32> to vector<2x32xf32>
    %205 = vector.extract_strided_slice %202 {offsets = [0, 64], sizes = [2, 32], strides = [1, 1]} : vector<2x128xf32> to vector<2x32xf32>
    %206 = vector.extract_strided_slice %197 {offsets = [0, 96], sizes = [2, 32], strides = [1, 1]} : vector<2x128xf32> to vector<2x32xf32>
    %207 = math.tanh %206 : vector<2x32xf32>
    %208 = arith.mulf %204, %188 : vector<2x32xf32>
    %209 = arith.mulf %203, %207 : vector<2x32xf32>
    %210 = arith.addf %208, %209 : vector<2x32xf32>
    %211 = math.tanh %210 : vector<2x32xf32>
    %212 = arith.mulf %205, %211 : vector<2x32xf32>
    %cst_44 = arith.constant 0.000000e+00 : f32
    %213 = vector.broadcast %cst_44 : f32 to vector<2x32xf32>
    %214 = arith.select %195, %212, %213 : vector<2x32xi1>, vector<2x32xf32>
    %215 = tpu.concatenate %41, %66, %91, %116, %141, %166, %191, %214 in 0 : vector<2x32xf32>, vector<2x32xf32>, vector<2x32xf32>, vector<2x32xf32>, vector<2x32xf32>, vector<2x32xf32>, vector<2x32xf32>, vector<2x32xf32> -> vector<16x32xf32>
    %216 = tpu.concatenate %214, %191, %166, %141, %116, %91, %66, %41 in 0 : vector<2x32xf32>, vector<2x32xf32>, vector<2x32xf32>, vector<2x32xf32>, vector<2x32xf32>, vector<2x32xf32>, vector<2x32xf32>, vector<2x32xf32> -> vector<16x32xf32>
    %217 = tpu.concatenate %215, %216 in 1 : vector<16x32xf32>, vector<16x32xf32> -> vector<16x64xf32>
    %c0_45 = arith.constant 0 : index
    %c0_46 = arith.constant 0 : index
    %218 = vector.load %arg5[%c0_45, %c0_46] : memref<64x128xf32, #tpu.memory_space<vmem>>, vector<64x128xf32>
    %cst_47 = arith.constant dense<0.000000e+00> : vector<16x128xf32>
    %219 = tpu.matmul %217, %218, %cst_47 {dimension_numbers = #tpu.dot_dimension_numbers<[1], [0], [0], [1], [0, 0, 1, 1], [], []>} : vector<16x64xf32>, vector<64x128xf32>, vector<16x128xf32> -> vector<16x128xf32>
    %c0_48 = arith.constant 0 : index
    %c0_49 = arith.constant 0 : index
    %220 = vector.load %arg6[%c0_48, %c0_49] : memref<1x128xf32, #tpu.memory_space<vmem>>, vector<1x128xf32>
    %221 = vector.broadcast %220 : vector<1x128xf32> to vector<16x128xf32>
    %222 = arith.addf %219, %221 : vector<16x128xf32>
    %cst_50 = arith.constant 0.000000e+00 : f32
    %223 = vector.broadcast %cst_50 : f32 to vector<2x32xf32>
    %cst_51 = arith.constant 0.000000e+00 : f32
    %224 = vector.broadcast %cst_51 : f32 to vector<2x32xf32>
    %225 = vector.extract_strided_slice %222 {offsets = [0, 0], sizes = [2, 128], strides = [1, 1]} : vector<16x128xf32> to vector<2x128xf32>
    %226 = vector.extract_strided_slice %0 {offsets = [0, 0], sizes = [2, 32], strides = [1, 1]} : vector<16x32xf32> to vector<2x32xf32>
    %cst_52 = arith.constant 0.000000e+00 : f32
    %227 = vector.broadcast %cst_52 : f32 to vector<2x32xf32>
    %228 = arith.cmpf ogt, %226, %227 : vector<2x32xf32>
    %cst_53 = arith.constant dense<0.000000e+00> : vector<2x128xf32>
    %229 = tpu.matmul %223, %2, %cst_53 {dimension_numbers = #tpu.dot_dimension_numbers<[1], [0], [0], [1], [0, 0, 1, 1], [], []>} : vector<2x32xf32>, vector<32x128xf32>, vector<2x128xf32> -> vector<2x128xf32>
    %230 = arith.addf %225, %229 : vector<2x128xf32>
    %231 = arith.negf %230 : vector<2x128xf32>
    %232 = math.exp %231 : vector<2x128xf32>
    %cst_54 = arith.constant 1.000000e+00 : f32
    %233 = vector.broadcast %cst_54 : f32 to vector<2x128xf32>
    %234 = arith.addf %233, %232 : vector<2x128xf32>
    %235 = arith.divf %233, %234 : vector<2x128xf32>
    %236 = vector.extract_strided_slice %235 {offsets = [0, 0], sizes = [2, 32], strides = [1, 1]} : vector<2x128xf32> to vector<2x32xf32>
    %237 = vector.extract_strided_slice %235 {offsets = [0, 32], sizes = [2, 32], strides = [1, 1]} : vector<2x128xf32> to vector<2x32xf32>
    %238 = vector.extract_strided_slice %235 {offsets = [0, 64], sizes = [2, 32], strides = [1, 1]} : vector<2x128xf32> to vector<2x32xf32>
    %239 = vector.extract_strided_slice %230 {offsets = [0, 96], sizes = [2, 32], strides = [1, 1]} : vector<2x128xf32> to vector<2x32xf32>
    %240 = math.tanh %239 : vector<2x32xf32>
    %241 = arith.mulf %237, %224 : vector<2x32xf32>
    %242 = arith.mulf %236, %240 : vector<2x32xf32>
    %243 = arith.addf %241, %242 : vector<2x32xf32>
    %244 = math.tanh %243 : vector<2x32xf32>
    %245 = arith.mulf %238, %244 : vector<2x32xf32>
    %246 = arith.select %228, %243, %224 : vector<2x32xi1>, vector<2x32xf32>
    %247 = arith.select %228, %245, %223 : vector<2x32xi1>, vector<2x32xf32>
    %cst_55 = arith.constant 0.000000e+00 : f32
    %248 = vector.broadcast %cst_55 : f32 to vector<2x32xf32>
    %249 = arith.select %228, %245, %248 : vector<2x32xi1>, vector<2x32xf32>
    %250 = vector.extract_strided_slice %222 {offsets = [2, 0], sizes = [2, 128], strides = [1, 1]} : vector<16x128xf32> to vector<2x128xf32>
    %251 = vector.extract_strided_slice %0 {offsets = [2, 0], sizes = [2, 32], strides = [1, 1]} : vector<16x32xf32> to vector<2x32xf32>
    %cst_56 = arith.constant 0.000000e+00 : f32
    %252 = vector.broadcast %cst_56 : f32 to vector<2x32xf32>
    %253 = arith.cmpf ogt, %251, %252 : vector<2x32xf32>
    %cst_57 = arith.constant dense<0.000000e+00> : vector<2x128xf32>
    %254 = tpu.matmul %247, %2, %cst_57 {dimension_numbers = #tpu.dot_dimension_numbers<[1], [0], [0], [1], [0, 0, 1, 1], [], []>} : vector<2x32xf32>, vector<32x128xf32>, vector<2x128xf32> -> vector<2x128xf32>
    %255 = arith.addf %250, %254 : vector<2x128xf32>
    %256 = arith.negf %255 : vector<2x128xf32>
    %257 = math.exp %256 : vector<2x128xf32>
    %cst_58 = arith.constant 1.000000e+00 : f32
    %258 = vector.broadcast %cst_58 : f32 to vector<2x128xf32>
    %259 = arith.addf %258, %257 : vector<2x128xf32>
    %260 = arith.divf %258, %259 : vector<2x128xf32>
    %261 = vector.extract_strided_slice %260 {offsets = [0, 0], sizes = [2, 32], strides = [1, 1]} : vector<2x128xf32> to vector<2x32xf32>
    %262 = vector.extract_strided_slice %260 {offsets = [0, 32], sizes = [2, 32], strides = [1, 1]} : vector<2x128xf32> to vector<2x32xf32>
    %263 = vector.extract_strided_slice %260 {offsets = [0, 64], sizes = [2, 32], strides = [1, 1]} : vector<2x128xf32> to vector<2x32xf32>
    %264 = vector.extract_strided_slice %255 {offsets = [0, 96], sizes = [2, 32], strides = [1, 1]} : vector<2x128xf32> to vector<2x32xf32>
    %265 = math.tanh %264 : vector<2x32xf32>
    %266 = arith.mulf %262, %246 : vector<2x32xf32>
    %267 = arith.mulf %261, %265 : vector<2x32xf32>
    %268 = arith.addf %266, %267 : vector<2x32xf32>
    %269 = math.tanh %268 : vector<2x32xf32>
    %270 = arith.mulf %263, %269 : vector<2x32xf32>
    %271 = arith.select %253, %268, %246 : vector<2x32xi1>, vector<2x32xf32>
    %272 = arith.select %253, %270, %247 : vector<2x32xi1>, vector<2x32xf32>
    %cst_59 = arith.constant 0.000000e+00 : f32
    %273 = vector.broadcast %cst_59 : f32 to vector<2x32xf32>
    %274 = arith.select %253, %270, %273 : vector<2x32xi1>, vector<2x32xf32>
    %275 = vector.extract_strided_slice %222 {offsets = [4, 0], sizes = [2, 128], strides = [1, 1]} : vector<16x128xf32> to vector<2x128xf32>
    %276 = vector.extract_strided_slice %0 {offsets = [4, 0], sizes = [2, 32], strides = [1, 1]} : vector<16x32xf32> to vector<2x32xf32>
    %cst_60 = arith.constant 0.000000e+00 : f32
    %277 = vector.broadcast %cst_60 : f32 to vector<2x32xf32>
    %278 = arith.cmpf ogt, %276, %277 : vector<2x32xf32>
    %cst_61 = arith.constant dense<0.000000e+00> : vector<2x128xf32>
    %279 = tpu.matmul %272, %2, %cst_61 {dimension_numbers = #tpu.dot_dimension_numbers<[1], [0], [0], [1], [0, 0, 1, 1], [], []>} : vector<2x32xf32>, vector<32x128xf32>, vector<2x128xf32> -> vector<2x128xf32>
    %280 = arith.addf %275, %279 : vector<2x128xf32>
    %281 = arith.negf %280 : vector<2x128xf32>
    %282 = math.exp %281 : vector<2x128xf32>
    %cst_62 = arith.constant 1.000000e+00 : f32
    %283 = vector.broadcast %cst_62 : f32 to vector<2x128xf32>
    %284 = arith.addf %283, %282 : vector<2x128xf32>
    %285 = arith.divf %283, %284 : vector<2x128xf32>
    %286 = vector.extract_strided_slice %285 {offsets = [0, 0], sizes = [2, 32], strides = [1, 1]} : vector<2x128xf32> to vector<2x32xf32>
    %287 = vector.extract_strided_slice %285 {offsets = [0, 32], sizes = [2, 32], strides = [1, 1]} : vector<2x128xf32> to vector<2x32xf32>
    %288 = vector.extract_strided_slice %285 {offsets = [0, 64], sizes = [2, 32], strides = [1, 1]} : vector<2x128xf32> to vector<2x32xf32>
    %289 = vector.extract_strided_slice %280 {offsets = [0, 96], sizes = [2, 32], strides = [1, 1]} : vector<2x128xf32> to vector<2x32xf32>
    %290 = math.tanh %289 : vector<2x32xf32>
    %291 = arith.mulf %287, %271 : vector<2x32xf32>
    %292 = arith.mulf %286, %290 : vector<2x32xf32>
    %293 = arith.addf %291, %292 : vector<2x32xf32>
    %294 = math.tanh %293 : vector<2x32xf32>
    %295 = arith.mulf %288, %294 : vector<2x32xf32>
    %296 = arith.select %278, %293, %271 : vector<2x32xi1>, vector<2x32xf32>
    %297 = arith.select %278, %295, %272 : vector<2x32xi1>, vector<2x32xf32>
    %cst_63 = arith.constant 0.000000e+00 : f32
    %298 = vector.broadcast %cst_63 : f32 to vector<2x32xf32>
    %299 = arith.select %278, %295, %298 : vector<2x32xi1>, vector<2x32xf32>
    %300 = vector.extract_strided_slice %222 {offsets = [6, 0], sizes = [2, 128], strides = [1, 1]} : vector<16x128xf32> to vector<2x128xf32>
    %301 = vector.extract_strided_slice %0 {offsets = [6, 0], sizes = [2, 32], strides = [1, 1]} : vector<16x32xf32> to vector<2x32xf32>
    %cst_64 = arith.constant 0.000000e+00 : f32
    %302 = vector.broadcast %cst_64 : f32 to vector<2x32xf32>
    %303 = arith.cmpf ogt, %301, %302 : vector<2x32xf32>
    %cst_65 = arith.constant dense<0.000000e+00> : vector<2x128xf32>
    %304 = tpu.matmul %297, %2, %cst_65 {dimension_numbers = #tpu.dot_dimension_numbers<[1], [0], [0], [1], [0, 0, 1, 1], [], []>} : vector<2x32xf32>, vector<32x128xf32>, vector<2x128xf32> -> vector<2x128xf32>
    %305 = arith.addf %300, %304 : vector<2x128xf32>
    %306 = arith.negf %305 : vector<2x128xf32>
    %307 = math.exp %306 : vector<2x128xf32>
    %cst_66 = arith.constant 1.000000e+00 : f32
    %308 = vector.broadcast %cst_66 : f32 to vector<2x128xf32>
    %309 = arith.addf %308, %307 : vector<2x128xf32>
    %310 = arith.divf %308, %309 : vector<2x128xf32>
    %311 = vector.extract_strided_slice %310 {offsets = [0, 0], sizes = [2, 32], strides = [1, 1]} : vector<2x128xf32> to vector<2x32xf32>
    %312 = vector.extract_strided_slice %310 {offsets = [0, 32], sizes = [2, 32], strides = [1, 1]} : vector<2x128xf32> to vector<2x32xf32>
    %313 = vector.extract_strided_slice %310 {offsets = [0, 64], sizes = [2, 32], strides = [1, 1]} : vector<2x128xf32> to vector<2x32xf32>
    %314 = vector.extract_strided_slice %305 {offsets = [0, 96], sizes = [2, 32], strides = [1, 1]} : vector<2x128xf32> to vector<2x32xf32>
    %315 = math.tanh %314 : vector<2x32xf32>
    %316 = arith.mulf %312, %296 : vector<2x32xf32>
    %317 = arith.mulf %311, %315 : vector<2x32xf32>
    %318 = arith.addf %316, %317 : vector<2x32xf32>
    %319 = math.tanh %318 : vector<2x32xf32>
    %320 = arith.mulf %313, %319 : vector<2x32xf32>
    %321 = arith.select %303, %318, %296 : vector<2x32xi1>, vector<2x32xf32>
    %322 = arith.select %303, %320, %297 : vector<2x32xi1>, vector<2x32xf32>
    %cst_67 = arith.constant 0.000000e+00 : f32
    %323 = vector.broadcast %cst_67 : f32 to vector<2x32xf32>
    %324 = arith.select %303, %320, %323 : vector<2x32xi1>, vector<2x32xf32>
    %325 = vector.extract_strided_slice %222 {offsets = [8, 0], sizes = [2, 128], strides = [1, 1]} : vector<16x128xf32> to vector<2x128xf32>
    %326 = vector.extract_strided_slice %0 {offsets = [8, 0], sizes = [2, 32], strides = [1, 1]} : vector<16x32xf32> to vector<2x32xf32>
    %cst_68 = arith.constant 0.000000e+00 : f32
    %327 = vector.broadcast %cst_68 : f32 to vector<2x32xf32>
    %328 = arith.cmpf ogt, %326, %327 : vector<2x32xf32>
    %cst_69 = arith.constant dense<0.000000e+00> : vector<2x128xf32>
    %329 = tpu.matmul %322, %2, %cst_69 {dimension_numbers = #tpu.dot_dimension_numbers<[1], [0], [0], [1], [0, 0, 1, 1], [], []>} : vector<2x32xf32>, vector<32x128xf32>, vector<2x128xf32> -> vector<2x128xf32>
    %330 = arith.addf %325, %329 : vector<2x128xf32>
    %331 = arith.negf %330 : vector<2x128xf32>
    %332 = math.exp %331 : vector<2x128xf32>
    %cst_70 = arith.constant 1.000000e+00 : f32
    %333 = vector.broadcast %cst_70 : f32 to vector<2x128xf32>
    %334 = arith.addf %333, %332 : vector<2x128xf32>
    %335 = arith.divf %333, %334 : vector<2x128xf32>
    %336 = vector.extract_strided_slice %335 {offsets = [0, 0], sizes = [2, 32], strides = [1, 1]} : vector<2x128xf32> to vector<2x32xf32>
    %337 = vector.extract_strided_slice %335 {offsets = [0, 32], sizes = [2, 32], strides = [1, 1]} : vector<2x128xf32> to vector<2x32xf32>
    %338 = vector.extract_strided_slice %335 {offsets = [0, 64], sizes = [2, 32], strides = [1, 1]} : vector<2x128xf32> to vector<2x32xf32>
    %339 = vector.extract_strided_slice %330 {offsets = [0, 96], sizes = [2, 32], strides = [1, 1]} : vector<2x128xf32> to vector<2x32xf32>
    %340 = math.tanh %339 : vector<2x32xf32>
    %341 = arith.mulf %337, %321 : vector<2x32xf32>
    %342 = arith.mulf %336, %340 : vector<2x32xf32>
    %343 = arith.addf %341, %342 : vector<2x32xf32>
    %344 = math.tanh %343 : vector<2x32xf32>
    %345 = arith.mulf %338, %344 : vector<2x32xf32>
    %346 = arith.select %328, %343, %321 : vector<2x32xi1>, vector<2x32xf32>
    %347 = arith.select %328, %345, %322 : vector<2x32xi1>, vector<2x32xf32>
    %cst_71 = arith.constant 0.000000e+00 : f32
    %348 = vector.broadcast %cst_71 : f32 to vector<2x32xf32>
    %349 = arith.select %328, %345, %348 : vector<2x32xi1>, vector<2x32xf32>
    %350 = vector.extract_strided_slice %222 {offsets = [10, 0], sizes = [2, 128], strides = [1, 1]} : vector<16x128xf32> to vector<2x128xf32>
    %351 = vector.extract_strided_slice %0 {offsets = [10, 0], sizes = [2, 32], strides = [1, 1]} : vector<16x32xf32> to vector<2x32xf32>
    %cst_72 = arith.constant 0.000000e+00 : f32
    %352 = vector.broadcast %cst_72 : f32 to vector<2x32xf32>
    %353 = arith.cmpf ogt, %351, %352 : vector<2x32xf32>
    %cst_73 = arith.constant dense<0.000000e+00> : vector<2x128xf32>
    %354 = tpu.matmul %347, %2, %cst_73 {dimension_numbers = #tpu.dot_dimension_numbers<[1], [0], [0], [1], [0, 0, 1, 1], [], []>} : vector<2x32xf32>, vector<32x128xf32>, vector<2x128xf32> -> vector<2x128xf32>
    %355 = arith.addf %350, %354 : vector<2x128xf32>
    %356 = arith.negf %355 : vector<2x128xf32>
    %357 = math.exp %356 : vector<2x128xf32>
    %cst_74 = arith.constant 1.000000e+00 : f32
    %358 = vector.broadcast %cst_74 : f32 to vector<2x128xf32>
    %359 = arith.addf %358, %357 : vector<2x128xf32>
    %360 = arith.divf %358, %359 : vector<2x128xf32>
    %361 = vector.extract_strided_slice %360 {offsets = [0, 0], sizes = [2, 32], strides = [1, 1]} : vector<2x128xf32> to vector<2x32xf32>
    %362 = vector.extract_strided_slice %360 {offsets = [0, 32], sizes = [2, 32], strides = [1, 1]} : vector<2x128xf32> to vector<2x32xf32>
    %363 = vector.extract_strided_slice %360 {offsets = [0, 64], sizes = [2, 32], strides = [1, 1]} : vector<2x128xf32> to vector<2x32xf32>
    %364 = vector.extract_strided_slice %355 {offsets = [0, 96], sizes = [2, 32], strides = [1, 1]} : vector<2x128xf32> to vector<2x32xf32>
    %365 = math.tanh %364 : vector<2x32xf32>
    %366 = arith.mulf %362, %346 : vector<2x32xf32>
    %367 = arith.mulf %361, %365 : vector<2x32xf32>
    %368 = arith.addf %366, %367 : vector<2x32xf32>
    %369 = math.tanh %368 : vector<2x32xf32>
    %370 = arith.mulf %363, %369 : vector<2x32xf32>
    %371 = arith.select %353, %368, %346 : vector<2x32xi1>, vector<2x32xf32>
    %372 = arith.select %353, %370, %347 : vector<2x32xi1>, vector<2x32xf32>
    %cst_75 = arith.constant 0.000000e+00 : f32
    %373 = vector.broadcast %cst_75 : f32 to vector<2x32xf32>
    %374 = arith.select %353, %370, %373 : vector<2x32xi1>, vector<2x32xf32>
    %375 = vector.extract_strided_slice %222 {offsets = [12, 0], sizes = [2, 128], strides = [1, 1]} : vector<16x128xf32> to vector<2x128xf32>
    %376 = vector.extract_strided_slice %0 {offsets = [12, 0], sizes = [2, 32], strides = [1, 1]} : vector<16x32xf32> to vector<2x32xf32>
    %cst_76 = arith.constant 0.000000e+00 : f32
    %377 = vector.broadcast %cst_76 : f32 to vector<2x32xf32>
    %378 = arith.cmpf ogt, %376, %377 : vector<2x32xf32>
    %cst_77 = arith.constant dense<0.000000e+00> : vector<2x128xf32>
    %379 = tpu.matmul %372, %2, %cst_77 {dimension_numbers = #tpu.dot_dimension_numbers<[1], [0], [0], [1], [0, 0, 1, 1], [], []>} : vector<2x32xf32>, vector<32x128xf32>, vector<2x128xf32> -> vector<2x128xf32>
    %380 = arith.addf %375, %379 : vector<2x128xf32>
    %381 = arith.negf %380 : vector<2x128xf32>
    %382 = math.exp %381 : vector<2x128xf32>
    %cst_78 = arith.constant 1.000000e+00 : f32
    %383 = vector.broadcast %cst_78 : f32 to vector<2x128xf32>
    %384 = arith.addf %383, %382 : vector<2x128xf32>
    %385 = arith.divf %383, %384 : vector<2x128xf32>
    %386 = vector.extract_strided_slice %385 {offsets = [0, 0], sizes = [2, 32], strides = [1, 1]} : vector<2x128xf32> to vector<2x32xf32>
    %387 = vector.extract_strided_slice %385 {offsets = [0, 32], sizes = [2, 32], strides = [1, 1]} : vector<2x128xf32> to vector<2x32xf32>
    %388 = vector.extract_strided_slice %385 {offsets = [0, 64], sizes = [2, 32], strides = [1, 1]} : vector<2x128xf32> to vector<2x32xf32>
    %389 = vector.extract_strided_slice %380 {offsets = [0, 96], sizes = [2, 32], strides = [1, 1]} : vector<2x128xf32> to vector<2x32xf32>
    %390 = math.tanh %389 : vector<2x32xf32>
    %391 = arith.mulf %387, %371 : vector<2x32xf32>
    %392 = arith.mulf %386, %390 : vector<2x32xf32>
    %393 = arith.addf %391, %392 : vector<2x32xf32>
    %394 = math.tanh %393 : vector<2x32xf32>
    %395 = arith.mulf %388, %394 : vector<2x32xf32>
    %396 = arith.select %378, %393, %371 : vector<2x32xi1>, vector<2x32xf32>
    %397 = arith.select %378, %395, %372 : vector<2x32xi1>, vector<2x32xf32>
    %cst_79 = arith.constant 0.000000e+00 : f32
    %398 = vector.broadcast %cst_79 : f32 to vector<2x32xf32>
    %399 = arith.select %378, %395, %398 : vector<2x32xi1>, vector<2x32xf32>
    %400 = vector.extract_strided_slice %222 {offsets = [14, 0], sizes = [2, 128], strides = [1, 1]} : vector<16x128xf32> to vector<2x128xf32>
    %401 = vector.extract_strided_slice %0 {offsets = [14, 0], sizes = [2, 32], strides = [1, 1]} : vector<16x32xf32> to vector<2x32xf32>
    %cst_80 = arith.constant 0.000000e+00 : f32
    %402 = vector.broadcast %cst_80 : f32 to vector<2x32xf32>
    %403 = arith.cmpf ogt, %401, %402 : vector<2x32xf32>
    %cst_81 = arith.constant dense<0.000000e+00> : vector<2x128xf32>
    %404 = tpu.matmul %397, %2, %cst_81 {dimension_numbers = #tpu.dot_dimension_numbers<[1], [0], [0], [1], [0, 0, 1, 1], [], []>} : vector<2x32xf32>, vector<32x128xf32>, vector<2x128xf32> -> vector<2x128xf32>
    %405 = arith.addf %400, %404 : vector<2x128xf32>
    %406 = arith.negf %405 : vector<2x128xf32>
    %407 = math.exp %406 : vector<2x128xf32>
    %cst_82 = arith.constant 1.000000e+00 : f32
    %408 = vector.broadcast %cst_82 : f32 to vector<2x128xf32>
    %409 = arith.addf %408, %407 : vector<2x128xf32>
    %410 = arith.divf %408, %409 : vector<2x128xf32>
    %411 = vector.extract_strided_slice %410 {offsets = [0, 0], sizes = [2, 32], strides = [1, 1]} : vector<2x128xf32> to vector<2x32xf32>
    %412 = vector.extract_strided_slice %410 {offsets = [0, 32], sizes = [2, 32], strides = [1, 1]} : vector<2x128xf32> to vector<2x32xf32>
    %413 = vector.extract_strided_slice %410 {offsets = [0, 64], sizes = [2, 32], strides = [1, 1]} : vector<2x128xf32> to vector<2x32xf32>
    %414 = vector.extract_strided_slice %405 {offsets = [0, 96], sizes = [2, 32], strides = [1, 1]} : vector<2x128xf32> to vector<2x32xf32>
    %415 = math.tanh %414 : vector<2x32xf32>
    %416 = arith.mulf %412, %396 : vector<2x32xf32>
    %417 = arith.mulf %411, %415 : vector<2x32xf32>
    %418 = arith.addf %416, %417 : vector<2x32xf32>
    %419 = math.tanh %418 : vector<2x32xf32>
    %420 = arith.mulf %413, %419 : vector<2x32xf32>
    %cst_83 = arith.constant 0.000000e+00 : f32
    %421 = vector.broadcast %cst_83 : f32 to vector<2x32xf32>
    %422 = arith.select %403, %420, %421 : vector<2x32xi1>, vector<2x32xf32>
    %423 = arith.addf %249, %274 : vector<2x32xf32>
    %424 = arith.addf %423, %299 : vector<2x32xf32>
    %425 = arith.addf %424, %324 : vector<2x32xf32>
    %426 = arith.addf %425, %349 : vector<2x32xf32>
    %427 = arith.addf %426, %374 : vector<2x32xf32>
    %428 = arith.addf %427, %399 : vector<2x32xf32>
    %429 = arith.addf %428, %422 : vector<2x32xf32>
    %cst_84 = arith.constant 1.250000e-01 : f32
    %430 = vector.broadcast %cst_84 : f32 to vector<2x32xf32>
    %431 = arith.mulf %429, %430 : vector<2x32xf32>
    %c0_85 = arith.constant 0 : index
    %c0_86 = arith.constant 0 : index
    %432 = vector.load %arg8[%c0_85, %c0_86] : memref<32x64xf32, #tpu.memory_space<vmem>>, vector<32x64xf32>
    %cst_87 = arith.constant dense<0.000000e+00> : vector<2x64xf32>
    %433 = tpu.matmul %431, %432, %cst_87 {dimension_numbers = #tpu.dot_dimension_numbers<[1], [0], [0], [1], [0, 0, 1, 1], [], []>} : vector<2x32xf32>, vector<32x64xf32>, vector<2x64xf32> -> vector<2x64xf32>
    %c0_88 = arith.constant 0 : index
    %c0_89 = arith.constant 0 : index
    %434 = vector.load %arg9[%c0_88, %c0_89] : memref<1x64xf32, #tpu.memory_space<vmem>>, vector<1x64xf32>
    %435 = vector.broadcast %434 : vector<1x64xf32> to vector<2x64xf32>
    %436 = arith.addf %433, %435 : vector<2x64xf32>
    %cst_90 = arith.constant 0.000000e+00 : f32
    %437 = vector.broadcast %cst_90 : f32 to vector<2x64xf32>
    %438 = arith.maximumf %436, %437 : vector<2x64xf32>
    %c0_91 = arith.constant 0 : index
    %c0_92 = arith.constant 0 : index
    %439 = vector.load %arg10[%c0_91, %c0_92] : memref<64x4xf32, #tpu.memory_space<vmem>>, vector<64x4xf32>
    %cst_93 = arith.constant dense<0.000000e+00> : vector<2x4xf32>
    %440 = tpu.matmul %438, %439, %cst_93 {dimension_numbers = #tpu.dot_dimension_numbers<[1], [0], [0], [1], [0, 0, 1, 1], [], []>} : vector<2x64xf32>, vector<64x4xf32>, vector<2x4xf32> -> vector<2x4xf32>
    %c0_94 = arith.constant 0 : index
    %c0_95 = arith.constant 0 : index
    %441 = vector.load %arg11[%c0_94, %c0_95] : memref<1x4xf32, #tpu.memory_space<vmem>>, vector<1x4xf32>
    %442 = vector.broadcast %441 : vector<1x4xf32> to vector<2x4xf32>
    %443 = arith.addf %440, %442 : vector<2x4xf32>
    %c0_96 = arith.constant 0 : index
    %c0_97 = arith.constant 0 : index
    %444 = vector.load %arg12[%c0_96, %c0_97] : memref<2x4xf32, #tpu.memory_space<vmem>>, vector<2x4xf32>
    tpu.vector_store %arg12[%c0_96, %c0_97], %443 {strides = array<i32>} : memref<2x4xf32, #tpu.memory_space<vmem>>, vector<2x4xf32>,
    return
  }
}

</mosaic_0001>

<llo_original>
// kernel: text_based_forward.1
$region0: #{text_based_forward.1}
  #allocation0 [shape = 'u32[]', space=smem, size = 0x4, offset = 0x4, fixed_abs, tag = 'smem constant byte address 0x4 - core index']
  #allocation1 [shape = 'u32[144,128]{1,0:T(1,128)}', space=vmem, size = 0x12000, scoped, tag = 'internal scratch']
  %s0 = inlined_call_operand.vmem [shape: s32[16,1], index: 0, kind: input, shape index: {}]
  %s1 = inlined_call_operand.vmem [shape: s32[16,1], index: 1, kind: input, shape index: {}]
  %s2 = inlined_call_operand.vmem [shape: f32[16,32], index: 2, kind: input, shape index: {}]
  %s3 = inlined_call_operand.vmem [shape: f32[64,128], index: 3, kind: input, shape index: {}]
  %s4 = inlined_call_operand.vmem [shape: f32[32,128], index: 4, kind: input, shape index: {}]
  %s5 = inlined_call_operand.vmem [shape: f32[64,128], index: 5, kind: input, shape index: {}]
  %s6 = inlined_call_operand.vmem [shape: f32[1,128], index: 6, kind: input, shape index: {}]
  %s7 = inlined_call_operand.vmem [shape: f32[32,128], index: 7, kind: input, shape index: {}]
  %s8 = inlined_call_operand.vmem [shape: f32[32,64], index: 8, kind: input, shape index: {}]
  %s9 = inlined_call_operand.vmem [shape: f32[1,64], index: 9, kind: input, shape index: {}]
  %s10 = inlined_call_operand.vmem [shape: f32[64,4], index: 10, kind: input, shape index: {}]
  %s11 = inlined_call_operand.vmem [shape: f32[1,4], index: 11, kind: input, shape index: {}]
  %s12 = inlined_call_operand.hbm [shape: f32[2,4], index: 12, kind: output, shape index: {}]
  %s13 = sld [smem:[#allocation0]]
  $region58: #{text_based_forward.1} parent=0
    _
  %s15 = ssub.s32 1, %s13
  %s16 = scalar_select 0, %s15, %s13
  $region1: #{text_based_forward.1} parent=0
    #allocation2 [shape = 'u8[1024]{0}', space=vmem, size = 0x400, scoped, tag = 'output window, operand 0, single buffered']
    #allocation3 [shape = 's32[1]{0}', space=sflag, size = 0x4, scoped, tag = 'scoped memory for text_based_forward.1']
    %17 = vsyncpa [#allocation3], 0
    // Predicated region
    $region2: #{text_based_forward.1} parent=1 // pred_check
      _
    $region3: #{text_based_forward.1} parent=1 // pred_check_branch
      %19 = sbr.rel (0) target = $region5
    $region4: #{text_based_forward.1} parent=1 // pred_region
      _
    $region5: #{text_based_forward.1} parent=1 // pred_fallthru
      _
    // Predicated region
    $region6: #{text_based_forward.1} parent=1 // pred_check
      _
    $region7: #{text_based_forward.1} parent=1 // pred_check_branch
      %21 = sbr.rel (0) target = $region9
    $region8: #{text_based_forward.1} parent=1 // pred_region
      _
    $region9: #{text_based_forward.1} parent=1 // pred_fallthru
      _
    // Predicated region
    $region10: #{text_based_forward.1} parent=1 // pred_check
      _
    $region11: #{text_based_forward.1} parent=1 // pred_check_branch
      %23 = sbr.rel (0) target = $region13
    $region12: #{text_based_forward.1} parent=1 // pred_region
      _
    $region13: #{text_based_forward.1} parent=1 // pred_fallthru
      _
    // Predicated region
    $region14: #{text_based_forward.1} parent=1 // pred_check
      _
    $region15: #{text_based_forward.1} parent=1 // pred_check_branch
      %25 = sbr.rel (0) target = $region17
    $region16: #{text_based_forward.1} parent=1 // pred_region
      _
    $region17: #{text_based_forward.1} parent=1 // pred_fallthru
      _
    // Predicated region
    $region18: #{text_based_forward.1} parent=1 // pred_check
      _
    $region19: #{text_based_forward.1} parent=1 // pred_check_branch
      %27 = sbr.rel (0) target = $region21
    $region20: #{text_based_forward.1} parent=1 // pred_region
      _
    $region21: #{text_based_forward.1} parent=1 // pred_fallthru
      _
    // Predicated region
    $region22: #{text_based_forward.1} parent=1 // pred_check
      _
    $region23: #{text_based_forward.1} parent=1 // pred_check_branch
      %29 = sbr.rel (0) target = $region25
    $region24: #{text_based_forward.1} parent=1 // pred_region
      _
    $region25: #{text_based_forward.1} parent=1 // pred_fallthru
      _
    // Predicated region
    $region26: #{text_based_forward.1} parent=1 // pred_check
      _
    $region27: #{text_based_forward.1} parent=1 // pred_check_branch
      %31 = sbr.rel (0) target = $region29
    $region28: #{text_based_forward.1} parent=1 // pred_region
      _
    $region29: #{text_based_forward.1} parent=1 // pred_fallthru
      _
    // Predicated region
    $region30: #{text_based_forward.1} parent=1 // pred_check
      _
    $region31: #{text_based_forward.1} parent=1 // pred_check_branch
      %33 = sbr.rel (0) target = $region33
    $region32: #{text_based_forward.1} parent=1 // pred_region
      _
    $region33: #{text_based_forward.1} parent=1 // pred_fallthru
      _
    // Predicated region
    $region34: #{text_based_forward.1} parent=1 // pred_check
      _
    $region35: #{text_based_forward.1} parent=1 // pred_check_branch
      %35 = sbr.rel (0) target = $region37
    $region36: #{text_based_forward.1} parent=1 // pred_region
      _
    $region37: #{text_based_forward.1} parent=1 // pred_fallthru
      _
    // Predicated region
    $region38: #{text_based_forward.1} parent=1 // pred_check
      _
    $region39: #{text_based_forward.1} parent=1 // pred_check_branch
      %37 = sbr.rel (0) target = $region41
    $region40: #{text_based_forward.1} parent=1 // pred_region
      _
    $region41: #{text_based_forward.1} parent=1 // pred_fallthru
      _
    // Predicated region
    $region42: #{text_based_forward.1} parent=1 // pred_check
      _
    $region43: #{text_based_forward.1} parent=1 // pred_check_branch
      %39 = sbr.rel (0) target = $region45
    $region44: #{text_based_forward.1} parent=1 // pred_region
      _
    $region45: #{text_based_forward.1} parent=1 // pred_fallthru
      _
    // Predicated region
    $region46: #{text_based_forward.1} parent=1 // pred_check
      _
    $region47: #{text_based_forward.1} parent=1 // pred_check_branch
      %41 = sbr.rel (0) target = $region49
    $region48: #{text_based_forward.1} parent=1 // pred_region
      _
    $region49: #{text_based_forward.1} parent=1 // pred_fallthru
      _
    %v42 = vld [vmem:[%s2] sm:$0xff]
    %v43 = vld [vmem:[%s2 + $0x8] sm:$0xff]
    %v44 = vld [vmem:[%s4] sm:$0xff]
    %v45 = vld [vmem:[%s4 + $0x8] sm:$0xff]
    %v46 = vld [vmem:[%s4 + $0x10] sm:$0xff]
    %v47 = vld [vmem:[%s4 + $0x18] sm:$0xff]
    %v48 = vld [vmem:[%s7] sm:$0xff]
    %v49 = vld [vmem:[%s7 + $0x8] sm:$0xff]
    %v50 = vld [vmem:[%s7 + $0x10] sm:$0xff]
    %v51 = vld [vmem:[%s7 + $0x18] sm:$0xff]
    %v52 = vlaneseq
    %v53 = vand.u32 %v52, 127
    %v54 = vld [vmem:[%s0] sm:$0xff]
    %v55 = vld [vmem:[%s0 + $0x8] sm:$0xff]
    %56 = vset.pattern.permute.xlu0 0
    %57 = vperm.xlu0 %56, %v54
    %v58 = vpop.permute.xlu0 %57
    %59 = vset.pattern.permute.xlu0 0
    %60 = vperm.xlu0 %59, %v55
    %v61 = vpop.permute.xlu0 %60
    %vm62 = vcmp.eq.s32.totalorder %v53, %v58
    %vm63 = vcmp.eq.s32.totalorder %v53, %v61
    %v64 = vld [vmem:[%s1] sm:$0xff]
    %v65 = vld [vmem:[%s1 + $0x8] sm:$0xff]
    %66 = vset.pattern.permute.xlu0 0
    %67 = vperm.xlu0 %66, %v64
    %v68 = vpop.permute.xlu0 %67
    %69 = vset.pattern.permute.xlu0 0
    %70 = vperm.xlu0 %69, %v65
    %v71 = vpop.permute.xlu0 %70
    %vm72 = vcmp.eq.s32.totalorder %v53, %v68
    %vm73 = vcmp.eq.s32.totalorder %v53, %v71
    %vm74 = vmor %vm62, %vm72
    %vm75 = vmor %vm63, %vm73
    %v76 = vsel %vm74, 1, 0
    %v77 = vsel %vm75, 1, 0
    %v78 = vcvt.s32.f32 %v76
    %v79 = vcvt.s32.f32 %v77
    %v80 = vld [vmem:[%s3] sm:$0xff]
    %v81 = vld [vmem:[%s3 + $0x8] sm:$0xff]
    %v82 = vld [vmem:[%s3 + $0x10] sm:$0xff]
    %v83 = vld [vmem:[%s3 + $0x18] sm:$0xff]
    %v84 = vld [vmem:[%s3 + $0x20] sm:$0xff]
    %v85 = vld [vmem:[%s3 + $0x28] sm:$0xff]
    %v86 = vld [vmem:[%s3 + $0x30] sm:$0xff]
    %v87 = vld [vmem:[%s3 + $0x38] sm:$0xff]
    %vm88 = vcmask 523264
    %v90 = vsel %vm88, %v78, 0
    %v93 = vsel %vm88, %v79, 0
    %95 = vmatprep.subr.mxu0 0.0
    %96 = vmatpush1.msra.mxu0 0.0
    %97 = vmatprep.subr.mxu0 0.0
    %98 = vmatpush1.msra.mxu0 0.0
    %99 = vmatprep.subr.mxu0 0.0
    %100 = vmatpush1.msra.mxu0 0.0
    %101 = vmatprep.subr.mxu0 0.0
    %102 = vmatpush1.msra.mxu0 0.0
    %103 = vmatprep.subr.mxu0 0.0
    %104 = vmatpush1.msra.mxu0 0.0
    %105 = vmatprep.subr.mxu0 0.0
    %106 = vmatpush1.msra.mxu0 0.0
    %107 = vmatprep.subr.mxu0 0.0
    %108 = vmatpush1.msra.mxu0 0.0
    %109 = vmatprep.subr.mxu0 0.0
    %110 = vmatpush1.msra.mxu0 0.0
    %111 = vmatprep.subr.mxu0 0.0
    %112 = vmatpush1.msra.mxu0 %v87
    %113 = vmatprep.subr.mxu0 0.0
    %114 = vmatpush1.msra.mxu0 %v86
    %115 = vmatprep.subr.mxu0 0.0
    %116 = vmatpush1.msra.mxu0 %v85
    %117 = vmatprep.subr.mxu0 0.0
    %118 = vmatpush1.msra.mxu0 %v84
    %119 = vmatprep.subr.mxu0 0.0
    %120 = vmatpush1.msra.mxu0 %v83
    %121 = vmatprep.subr.mxu0 0.0
    %122 = vmatpush1.msra.mxu0 %v82
    %123 = vmatprep.subr.mxu0 0.0
    %124 = vmatpush1.msra.mxu0 %v81
    %125 = vmatprep.subr.mxu0 0.0
    %126 = vmatpush1.msra.mxu0 %v80
    %127 = vmatprep.subr.mxu0 0.0
    %128 = vmatpush2.msra.mxu0 0.0
    %129 = vmatprep.subr.mxu0 0.0
    %130 = vmatpush2.msra.mxu0 0.0
    %131 = vmatprep.subr.mxu0 0.0
    %132 = vmatpush2.msra.mxu0 0.0
    %133 = vmatprep.subr.mxu0 0.0
    %134 = vmatpush2.msra.mxu0 0.0
    %135 = vmatprep.subr.mxu0 0.0
    %136 = vmatpush2.msra.mxu0 0.0
    %137 = vmatprep.subr.mxu0 0.0
    %138 = vmatpush2.msra.mxu0 0.0
    %139 = vmatprep.subr.mxu0 0.0
    %140 = vmatpush2.msra.mxu0 0.0
    %141 = vmatprep.subr.mxu0 0.0
    %142 = vmatpush2.msra.mxu0 0.0
    %143 = vmatprep.subr.mxu0 0.0
    %144 = vmatpush2.msra.mxu0 0.0
    %145 = vmatprep.subr.mxu0 0.0
    %146 = vmatpush2.msra.mxu0 0.0
    %147 = vmatprep.subr.mxu0 0.0
    %148 = vmatpush2.msra.mxu0 0.0
    %149 = vmatprep.subr.mxu0 0.0
    %150 = vmatpush2.msra.mxu0 0.0
    %151 = vmatprep.subr.mxu0 0.0
    %152 = vmatpush2.msra.mxu0 0.0
    %153 = vmatprep.subr.mxu0 0.0
    %154 = vmatpush2.msra.mxu0 0.0
    %155 = vmatprep.subr.mxu0 0.0
    %156 = vmatpush2.msra.mxu0 0.0
    %157 = vmatprep.subr.mxu0 0.0
    %158 = vmatpush2.msra.mxu0 0.0
    %159 = vmatprep.mubr.f32.mxu0 0.0
    %160 = vmatmul.mubr.f32.gmra.mxu0 %v90
    %v161 = vpop.f32.mrf.mxu0
    %v162 = vadd.f32 0.0, %v161
    %v163 = vpop.f32.mrf.mxu0
    %164 = vmatprep.mubr.f32.mxu0 0.0
    %165 = vmatmul.mubr.f32.gmra.mxu0 %v93
    %v166 = vpop.f32.mrf.mxu0
    %v167 = vadd.f32 0.0, %v166
    %v168 = vpop.f32.mrf.mxu0
    %169 = vdwg.mxu0
    %vm170 = vcmp.gt.f32.partialorder %v42, 0.0
    %vm171 = vcmask 261120
    %v173 = vsel %vm171, 0.0, 0
    %175 = vmatprep.subr.mxu0 0.0
    %176 = vmatpush1.msra.mxu0 0.0
    %177 = vmatprep.subr.mxu0 0.0
    %178 = vmatpush1.msra.mxu0 0.0
    %179 = vmatprep.subr.mxu0 0.0
    %180 = vmatpush1.msra.mxu0 0.0
    %181 = vmatprep.subr.mxu0 0.0
    %182 = vmatpush1.msra.mxu0 0.0
    %183 = vmatprep.subr.mxu0 0.0
    %184 = vmatpush1.msra.mxu0 0.0
    %185 = vmatprep.subr.mxu0 0.0
    %186 = vmatpush1.msra.mxu0 0.0
    %187 = vmatprep.subr.mxu0 0.0
    %188 = vmatpush1.msra.mxu0 0.0
    %189 = vmatprep.subr.mxu0 0.0
    %190 = vmatpush1.msra.mxu0 0.0
    %191 = vmatprep.subr.mxu0 0.0
    %192 = vmatpush1.msra.mxu0 0.0
    %193 = vmatprep.subr.mxu0 0.0
    %194 = vmatpush1.msra.mxu0 0.0
    %195 = vmatprep.subr.mxu0 0.0
    %196 = vmatpush1.msra.mxu0 0.0
    %197 = vmatprep.subr.mxu0 0.0
    %198 = vmatpush1.msra.mxu0 0.0
    %199 = vmatprep.subr.mxu0 0.0
    %200 = vmatpush1.msra.mxu0 %v47
    %201 = vmatprep.subr.mxu0 0.0
    %202 = vmatpush1.msra.mxu0 %v46
    %203 = vmatprep.subr.mxu0 0.0
    %204 = vmatpush1.msra.mxu0 %v45
    %205 = vmatprep.subr.mxu0 0.0
    %206 = vmatpush1.msra.mxu0 %v44
    %207 = vmatprep.subr.mxu0 0.0
    %208 = vmatpush2.msra.mxu0 0.0
    %209 = vmatprep.subr.mxu0 0.0
    %210 = vmatpush2.msra.mxu0 0.0
    %211 = vmatprep.subr.mxu0 0.0
    %212 = vmatpush2.msra.mxu0 0.0
    %213 = vmatprep.subr.mxu0 0.0
    %214 = vmatpush2.msra.mxu0 0.0
    %215 = vmatprep.subr.mxu0 0.0
    %216 = vmatpush2.msra.mxu0 0.0
    %217 = vmatprep.subr.mxu0 0.0
    %218 = vmatpush2.msra.mxu0 0.0
    %219 = vmatprep.subr.mxu0 0.0
    %220 = vmatpush2.msra.mxu0 0.0
    %221 = vmatprep.subr.mxu0 0.0
    %222 = vmatpush2.msra.mxu0 0.0
    %223 = vmatprep.subr.mxu0 0.0
    %224 = vmatpush2.msra.mxu0 0.0
    %225 = vmatprep.subr.mxu0 0.0
    %226 = vmatpush2.msra.mxu0 0.0
    %227 = vmatprep.subr.mxu0 0.0
    %228 = vmatpush2.msra.mxu0 0.0
    %229 = vmatprep.subr.mxu0 0.0
    %230 = vmatpush2.msra.mxu0 0.0
    %231 = vmatprep.subr.mxu0 0.0
    %232 = vmatpush2.msra.mxu0 0.0
    %233 = vmatprep.subr.mxu0 0.0
    %234 = vmatpush2.msra.mxu0 0.0
    %235 = vmatprep.subr.mxu0 0.0
    %236 = vmatpush2.msra.mxu0 0.0
    %237 = vmatprep.subr.mxu0 0.0
    %238 = vmatpush2.msra.mxu0 0.0
    %239 = vmatprep.mubr.f32.mxu0 0.0
    %240 = vmatmul.mubr.f32.gmra.mxu0 %v173
    %v241 = vpop.f32.mrf.mxu0
    %v242 = vadd.f32 0.0, %v241
    %v243 = vpop.f32.mrf.mxu0
    %244 = vdwg.mxu0
    %v245 = vadd.f32 %v162, %v242
    %v246 = vxor.u32 %v245, 2147483648
    %v247 = vmul.f32 %v246, 1.442695
    %v248 = vpow.pop %v247
    %v249 = vadd.f32 %v248, 1.0
    %v250 = vrcp.pop %v249
    %v251 = vmul.f32 1.0, %v250
    %v252 = vtanh.pop %v245
    %v253 = vmul.f32 %v251, 0.0
    %255 = vrot.lane.b32.xlu0 %v252, 32
    %v256 = vpop.permute.xlu0 %255
    %v258 = vmul.f32 %v251, %v256
    %260 = vrot.lane.b32.xlu0 %v258, 32
    %v261 = vpop.permute.xlu0 %260
    %v263 = vadd.f32 %v253, %v261
    %v264 = vtanh.pop %v263
    %266 = vrot.lane.b32.xlu0 %v264, 32
    %v267 = vpop.permute.xlu0 %266
    %v269 = vmul.f32 %v251, %v267
    %271 = vrot.lane.b32.xlu0 %v263, 96
    %v272 = vpop.permute.xlu0 %271
    %v274 = vsel %vm170, %v272, 0.0
    %276 = vrot.lane.b32.xlu0 %v269, 64
    %v277 = vpop.permute.xlu0 %276
    %v279 = vsel %vm170, %v277, 0.0
    %v281 = vsel %vm171, %v279, 0
    %283 = vmatprep.subr.mxu0 0.0
    %284 = vmatpush1.msra.mxu0 0.0
    %285 = vmatprep.subr.mxu0 0.0
    %286 = vmatpush1.msra.mxu0 0.0
    %287 = vmatprep.subr.mxu0 0.0
    %288 = vmatpush1.msra.mxu0 0.0
    %289 = vmatprep.subr.mxu0 0.0
    %290 = vmatpush1.msra.mxu0 0.0
    %291 = vmatprep.subr.mxu0 0.0
    %292 = vmatpush1.msra.mxu0 0.0
    %293 = vmatprep.subr.mxu0 0.0
    %294 = vmatpush1.msra.mxu0 0.0
    %295 = vmatprep.subr.mxu0 0.0
    %296 = vmatpush1.msra.mxu0 0.0
    %297 = vmatprep.subr.mxu0 0.0
    %298 = vmatpush1.msra.mxu0 0.0
    %299 = vmatprep.subr.mxu0 0.0
    %300 = vmatpush1.msra.mxu0 0.0
    %301 = vmatprep.subr.mxu0 0.0
    %302 = vmatpush1.msra.mxu0 0.0
    %303 = vmatprep.subr.mxu0 0.0
    %304 = vmatpush1.msra.mxu0 0.0
    %305 = vmatprep.subr.mxu0 0.0
    %306 = vmatpush1.msra.mxu0 0.0
    %307 = vmatprep.subr.mxu0 0.0
    %308 = vmatpush1.msra.mxu0 %v47
    %309 = vmatprep.subr.mxu0 0.0
    %310 = vmatpush1.msra.mxu0 %v46
    %311 = vmatprep.subr.mxu0 0.0
    %312 = vmatpush1.msra.mxu0 %v45
    %313 = vmatprep.subr.mxu0 0.0
    %314 = vmatpush1.msra.mxu0 %v44
    %315 = vmatprep.subr.mxu0 0.0
    %316 = vmatpush2.msra.mxu0 0.0
    %317 = vmatprep.subr.mxu0 0.0
    %318 = vmatpush2.msra.mxu0 0.0
    %319 = vmatprep.subr.mxu0 0.0
    %320 = vmatpush2.msra.mxu0 0.0
    %321 = vmatprep.subr.mxu0 0.0
    %322 = vmatpush2.msra.mxu0 0.0
    %323 = vmatprep.subr.mxu0 0.0
    %324 = vmatpush2.msra.mxu0 0.0
    %325 = vmatprep.subr.mxu0 0.0
    %326 = vmatpush2.msra.mxu0 0.0
    %327 = vmatprep.subr.mxu0 0.0
    %328 = vmatpush2.msra.mxu0 0.0
    %329 = vmatprep.subr.mxu0 0.0
    %330 = vmatpush2.msra.mxu0 0.0
    %331 = vmatprep.subr.mxu0 0.0
    %332 = vmatpush2.msra.mxu0 0.0
    %333 = vmatprep.subr.mxu0 0.0
    %334 = vmatpush2.msra.mxu0 0.0
    %335 = vmatprep.subr.mxu0 0.0
    %336 = vmatpush2.msra.mxu0 0.0
    %337 = vmatprep.subr.mxu0 0.0
    %338 = vmatpush2.msra.mxu0 0.0
    %339 = vmatprep.subr.mxu0 0.0
    %340 = vmatpush2.msra.mxu0 0.0
    %341 = vmatprep.subr.mxu0 0.0
    %342 = vmatpush2.msra.mxu0 0.0
    %343 = vmatprep.subr.mxu0 0.0
    %344 = vmatpush2.msra.mxu0 0.0
    %345 = vmatprep.subr.mxu0 0.0
    %346 = vmatpush2.msra.mxu0 0.0
    %347 = vmatprep.mubr.f32.mxu0 0.0
    %348 = vmatmul.mubr.f32.gmra.mxu0 %v281
    %v349 = vpop.f32.mrf.mxu0
    %v350 = vadd.f32 0.0, %v349
    %v351 = vpop.f32.mrf.mxu0
    %352 = vdwg.mxu0
    %v354 = vrot.slane %v350, 6
    %v356 = vadd.f32 %v162, %v354
    %v357 = vxor.u32 %v356, 2147483648
    %v358 = vmul.f32 %v357, 1.442695
    %v359 = vpow.pop %v358
    %v360 = vadd.f32 %v359, 1.0
    %v361 = vrcp.pop %v360
    %v362 = vmul.f32 1.0, %v361
    %v363 = vtanh.pop %v356
    %v365 = vrot.slane %v274, 6
    %366 = vrot.lane.b32.xlu0 %v365, 32
    %v367 = vpop.permute.xlu0 %366
    %v369 = vmul.f32 %v362, %v367
    %371 = vrot.lane.b32.xlu0 %v363, 32
    %v372 = vpop.permute.xlu0 %371
    %v374 = vmul.f32 %v362, %v372
    %376 = vrot.lane.b32.xlu0 %v374, 32
    %v377 = vpop.permute.xlu0 %376
    %v379 = vadd.f32 %v369, %v377
    %v380 = vtanh.pop %v379
    %382 = vrot.lane.b32.xlu0 %v380, 32
    %v383 = vpop.permute.xlu0 %382
    %v385 = vmul.f32 %v362, %v383
    %387 = vrot.lane.b32.xlu0 %v379, 96
    %v388 = vpop.permute.xlu0 %387
    %v391 = vsel %vm170, %v388, %v365
    %393 = vrot.lane.b32.xlu0 %v385, 64
    %v394 = vpop.permute.xlu0 %393
    %v396 = vrot.slane %v279, 6
    %v398 = vsel %vm170, %v394, %v396
    %v399 = vsel %vm170, %v394, 0.0
    %v401 = vrot.slane %v398, 2
    %v402 = vsel %vm171, %v401, 0
    %404 = vmatprep.subr.mxu0 0.0
    %405 = vmatpush1.msra.mxu0 0.0
    %406 = vmatprep.subr.mxu0 0.0
    %407 = vmatpush1.msra.mxu0 0.0
    %408 = vmatprep.subr.mxu0 0.0
    %409 = vmatpush1.msra.mxu0 0.0
    %410 = vmatprep.subr.mxu0 0.0
    %411 = vmatpush1.msra.mxu0 0.0
    %412 = vmatprep.subr.mxu0 0.0
    %413 = vmatpush1.msra.mxu0 0.0
    %414 = vmatprep.subr.mxu0 0.0
    %415 = vmatpush1.msra.mxu0 0.0
    %416 = vmatprep.subr.mxu0 0.0
    %417 = vmatpush1.msra.mxu0 0.0
    %418 = vmatprep.subr.mxu0 0.0
    %419 = vmatpush1.msra.mxu0 0.0
    %420 = vmatprep.subr.mxu0 0.0
    %421 = vmatpush1.msra.mxu0 0.0
    %422 = vmatprep.subr.mxu0 0.0
    %423 = vmatpush1.msra.mxu0 0.0
    %424 = vmatprep.subr.mxu0 0.0
    %425 = vmatpush1.msra.mxu0 0.0
    %426 = vmatprep.subr.mxu0 0.0
    %427 = vmatpush1.msra.mxu0 0.0
    %428 = vmatprep.subr.mxu0 0.0
    %429 = vmatpush1.msra.mxu0 %v47
    %430 = vmatprep.subr.mxu0 0.0
    %431 = vmatpush1.msra.mxu0 %v46
    %432 = vmatprep.subr.mxu0 0.0
    %433 = vmatpush1.msra.mxu0 %v45
    %434 = vmatprep.subr.mxu0 0.0
    %435 = vmatpush1.msra.mxu0 %v44
    %436 = vmatprep.subr.mxu0 0.0
    %437 = vmatpush2.msra.mxu0 0.0
    %438 = vmatprep.subr.mxu0 0.0
    %439 = vmatpush2.msra.mxu0 0.0
    %440 = vmatprep.subr.mxu0 0.0
    %441 = vmatpush2.msra.mxu0 0.0
    %442 = vmatprep.subr.mxu0 0.0
    %443 = vmatpush2.msra.mxu0 0.0
    %444 = vmatprep.subr.mxu0 0.0
    %445 = vmatpush2.msra.mxu0 0.0
    %446 = vmatprep.subr.mxu0 0.0
    %447 = vmatpush2.msra.mxu0 0.0
    %448 = vmatprep.subr.mxu0 0.0
    %449 = vmatpush2.msra.mxu0 0.0
    %450 = vmatprep.subr.mxu0 0.0
    %451 = vmatpush2.msra.mxu0 0.0
    %452 = vmatprep.subr.mxu0 0.0
    %453 = vmatpush2.msra.mxu0 0.0
    %454 = vmatprep.subr.mxu0 0.0
    %455 = vmatpush2.msra.mxu0 0.0
    %456 = vmatprep.subr.mxu0 0.0
    %457 = vmatpush2.msra.mxu0 0.0
    %458 = vmatprep.subr.mxu0 0.0
    %459 = vmatpush2.msra.mxu0 0.0
    %460 = vmatprep.subr.mxu0 0.0
    %461 = vmatpush2.msra.mxu0 0.0
    %462 = vmatprep.subr.mxu0 0.0
    %463 = vmatpush2.msra.mxu0 0.0
    %464 = vmatprep.subr.mxu0 0.0
    %465 = vmatpush2.msra.mxu0 0.0
    %466 = vmatprep.subr.mxu0 0.0
    %467 = vmatpush2.msra.mxu0 0.0
    %468 = vmatprep.mubr.f32.mxu0 0.0
    %469 = vmatmul.mubr.f32.gmra.mxu0 %v402
    %v470 = vpop.f32.mrf.mxu0
    %v471 = vadd.f32 0.0, %v470
    %v472 = vpop.f32.mrf.mxu0
    %473 = vdwg.mxu0
    %v475 = vrot.slane %v471, 4
    %v477 = vadd.f32 %v162, %v475
    %v478 = vxor.u32 %v477, 2147483648
    %v479 = vmul.f32 %v478, 1.442695
    %v480 = vpow.pop %v479
    %v481 = vadd.f32 %v480, 1.0
    %v482 = vrcp.pop %v481
    %v483 = vmul.f32 1.0, %v482
    %v484 = vtanh.pop %v477
    %v486 = vrot.slane %v391, 6
    %487 = vrot.lane.b32.xlu0 %v486, 32
    %v488 = vpop.permute.xlu0 %487
    %v490 = vmul.f32 %v483, %v488
    %492 = vrot.lane.b32.xlu0 %v484, 32
    %v493 = vpop.permute.xlu0 %492
    %v495 = vmul.f32 %v483, %v493
    %497 = vrot.lane.b32.xlu0 %v495, 32
    %v498 = vpop.permute.xlu0 %497
    %v500 = vadd.f32 %v490, %v498
    %v501 = vtanh.pop %v500
    %503 = vrot.lane.b32.xlu0 %v501, 32
    %v504 = vpop.permute.xlu0 %503
    %v506 = vmul.f32 %v483, %v504
    %508 = vrot.lane.b32.xlu0 %v500, 96
    %v509 = vpop.permute.xlu0 %508
    %v512 = vsel %vm170, %v509, %v486
    %514 = vrot.lane.b32.xlu0 %v506, 64
    %v515 = vpop.permute.xlu0 %514
    %v517 = vrot.slane %v398, 6
    %v519 = vsel %vm170, %v515, %v517
    %v520 = vsel %vm170, %v515, 0.0
    %v522 = vrot.slane %v519, 4
    %v523 = vsel %vm171, %v522, 0
    %525 = vmatprep.subr.mxu0 0.0
    %526 = vmatpush1.msra.mxu0 0.0
    %527 = vmatprep.subr.mxu0 0.0
    %528 = vmatpush1.msra.mxu0 0.0
    %529 = vmatprep.subr.mxu0 0.0
    %530 = vmatpush1.msra.mxu0 0.0
    %531 = vmatprep.subr.mxu0 0.0
    %532 = vmatpush1.msra.mxu0 0.0
    %533 = vmatprep.subr.mxu0 0.0
    %534 = vmatpush1.msra.mxu0 0.0
    %535 = vmatprep.subr.mxu0 0.0
    %536 = vmatpush1.msra.mxu0 0.0
    %537 = vmatprep.subr.mxu0 0.0
    %538 = vmatpush1.msra.mxu0 0.0
    %539 = vmatprep.subr.mxu0 0.0
    %540 = vmatpush1.msra.mxu0 0.0
    %541 = vmatprep.subr.mxu0 0.0
    %542 = vmatpush1.msra.mxu0 0.0
    %543 = vmatprep.subr.mxu0 0.0
    %544 = vmatpush1.msra.mxu0 0.0
    %545 = vmatprep.subr.mxu0 0.0
    %546 = vmatpush1.msra.mxu0 0.0
    %547 = vmatprep.subr.mxu0 0.0
    %548 = vmatpush1.msra.mxu0 0.0
    %549 = vmatprep.subr.mxu0 0.0
    %550 = vmatpush1.msra.mxu0 %v47
    %551 = vmatprep.subr.mxu0 0.0
    %552 = vmatpush1.msra.mxu0 %v46
    %553 = vmatprep.subr.mxu0 0.0
    %554 = vmatpush1.msra.mxu0 %v45
    %555 = vmatprep.subr.mxu0 0.0
    %556 = vmatpush1.msra.mxu0 %v44
    %557 = vmatprep.subr.mxu0 0.0
    %558 = vmatpush2.msra.mxu0 0.0
    %559 = vmatprep.subr.mxu0 0.0
    %560 = vmatpush2.msra.mxu0 0.0
    %561 = vmatprep.subr.mxu0 0.0
    %562 = vmatpush2.msra.mxu0 0.0
    %563 = vmatprep.subr.mxu0 0.0
    %564 = vmatpush2.msra.mxu0 0.0
    %565 = vmatprep.subr.mxu0 0.0
    %566 = vmatpush2.msra.mxu0 0.0
    %567 = vmatprep.subr.mxu0 0.0
    %568 = vmatpush2.msra.mxu0 0.0
    %569 = vmatprep.subr.mxu0 0.0
    %570 = vmatpush2.msra.mxu0 0.0
    %571 = vmatprep.subr.mxu0 0.0
    %572 = vmatpush2.msra.mxu0 0.0
    %573 = vmatprep.subr.mxu0 0.0
    %574 = vmatpush2.msra.mxu0 0.0
    %575 = vmatprep.subr.mxu0 0.0
    %576 = vmatpush2.msra.mxu0 0.0
    %577 = vmatprep.subr.mxu0 0.0
    %578 = vmatpush2.msra.mxu0 0.0
    %579 = vmatprep.subr.mxu0 0.0
    %580 = vmatpush2.msra.mxu0 0.0
    %581 = vmatprep.subr.mxu0 0.0
    %582 = vmatpush2.msra.mxu0 0.0
    %583 = vmatprep.subr.mxu0 0.0
    %584 = vmatpush2.msra.mxu0 0.0
    %585 = vmatprep.subr.mxu0 0.0
    %586 = vmatpush2.msra.mxu0 0.0
    %587 = vmatprep.subr.mxu0 0.0
    %588 = vmatpush2.msra.mxu0 0.0
    %589 = vmatprep.mubr.f32.mxu0 0.0
    %590 = vmatmul.mubr.f32.gmra.mxu0 %v523
    %v591 = vpop.f32.mrf.mxu0
    %v592 = vadd.f32 0.0, %v591
    %v593 = vpop.f32.mrf.mxu0
    %594 = vdwg.mxu0
    %v596 = vrot.slane %v592, 2
    %v598 = vadd.f32 %v162, %v596
    %v599 = vxor.u32 %v598, 2147483648
    %v600 = vmul.f32 %v599, 1.442695
    %v601 = vpow.pop %v600
    %v602 = vadd.f32 %v601, 1.0
    %v603 = vrcp.pop %v602
    %v604 = vmul.f32 1.0, %v603
    %v605 = vtanh.pop %v598
    %v607 = vrot.slane %v512, 6
    %608 = vrot.lane.b32.xlu0 %v607, 32
    %v609 = vpop.permute.xlu0 %608
    %v611 = vmul.f32 %v604, %v609
    %613 = vrot.lane.b32.xlu0 %v605, 32
    %v614 = vpop.permute.xlu0 %613
    %v616 = vmul.f32 %v604, %v614
    %618 = vrot.lane.b32.xlu0 %v616, 32
    %v619 = vpop.permute.xlu0 %618
    %v621 = vadd.f32 %v611, %v619
    %v622 = vtanh.pop %v621
    %624 = vrot.lane.b32.xlu0 %v622, 32
    %v625 = vpop.permute.xlu0 %624
    %v627 = vmul.f32 %v604, %v625
    %629 = vrot.lane.b32.xlu0 %v621, 96
    %v630 = vpop.permute.xlu0 %629
    %v633 = vsel %vm170, %v630, %v607
    %635 = vrot.lane.b32.xlu0 %v627, 64
    %v636 = vpop.permute.xlu0 %635
    %v638 = vrot.slane %v519, 6
    %v640 = vsel %vm170, %v636, %v638
    %v641 = vsel %vm170, %v636, 0.0
    %vm642 = vcmp.gt.f32.partialorder %v43, 0.0
    %v644 = vrot.slane %v640, 6
    %v645 = vsel %vm171, %v644, 0
    %647 = vmatprep.subr.mxu0 0.0
    %648 = vmatpush1.msra.mxu0 0.0
    %649 = vmatprep.subr.mxu0 0.0
    %650 = vmatpush1.msra.mxu0 0.0
    %651 = vmatprep.subr.mxu0 0.0
    %652 = vmatpush1.msra.mxu0 0.0
    %653 = vmatprep.subr.mxu0 0.0
    %654 = vmatpush1.msra.mxu0 0.0
    %655 = vmatprep.subr.mxu0 0.0
    %656 = vmatpush1.msra.mxu0 0.0
    %657 = vmatprep.subr.mxu0 0.0
    %658 = vmatpush1.msra.mxu0 0.0
    %659 = vmatprep.subr.mxu0 0.0
    %660 = vmatpush1.msra.mxu0 0.0
    %661 = vmatprep.subr.mxu0 0.0
    %662 = vmatpush1.msra.mxu0 0.0
    %663 = vmatprep.subr.mxu0 0.0
    %664 = vmatpush1.msra.mxu0 0.0
    %665 = vmatprep.subr.mxu0 0.0
    %666 = vmatpush1.msra.mxu0 0.0
    %667 = vmatprep.subr.mxu0 0.0
    %668 = vmatpush1.msra.mxu0 0.0
    %669 = vmatprep.subr.mxu0 0.0
    %670 = vmatpush1.msra.mxu0 0.0
    %671 = vmatprep.subr.mxu0 0.0
    %672 = vmatpush1.msra.mxu0 %v47
    %673 = vmatprep.subr.mxu0 0.0
    %674 = vmatpush1.msra.mxu0 %v46
    %675 = vmatprep.subr.mxu0 0.0
    %676 = vmatpush1.msra.mxu0 %v45
    %677 = vmatprep.subr.mxu0 0.0
    %678 = vmatpush1.msra.mxu0 %v44
    %679 = vmatprep.subr.mxu0 0.0
    %680 = vmatpush2.msra.mxu0 0.0
    %681 = vmatprep.subr.mxu0 0.0
    %682 = vmatpush2.msra.mxu0 0.0
    %683 = vmatprep.subr.mxu0 0.0
    %684 = vmatpush2.msra.mxu0 0.0
    %685 = vmatprep.subr.mxu0 0.0
    %686 = vmatpush2.msra.mxu0 0.0
    %687 = vmatprep.subr.mxu0 0.0
    %688 = vmatpush2.msra.mxu0 0.0
    %689 = vmatprep.subr.mxu0 0.0
    %690 = vmatpush2.msra.mxu0 0.0
    %691 = vmatprep.subr.mxu0 0.0
    %692 = vmatpush2.msra.mxu0 0.0
    %693 = vmatprep.subr.mxu0 0.0
    %694 = vmatpush2.msra.mxu0 0.0
    %695 = vmatprep.subr.mxu0 0.0
    %696 = vmatpush2.msra.mxu0 0.0
    %697 = vmatprep.subr.mxu0 0.0
    %698 = vmatpush2.msra.mxu0 0.0
    %699 = vmatprep.subr.mxu0 0.0
    %700 = vmatpush2.msra.mxu0 0.0
    %701 = vmatprep.subr.mxu0 0.0
    %702 = vmatpush2.msra.mxu0 0.0
    %703 = vmatprep.subr.mxu0 0.0
    %704 = vmatpush2.msra.mxu0 0.0
    %705 = vmatprep.subr.mxu0 0.0
    %706 = vmatpush2.msra.mxu0 0.0
    %707 = vmatprep.subr.mxu0 0.0
    %708 = vmatpush2.msra.mxu0 0.0
    %709 = vmatprep.subr.mxu0 0.0
    %710 = vmatpush2.msra.mxu0 0.0
    %711 = vmatprep.mubr.f32.mxu0 0.0
    %712 = vmatmul.mubr.f32.gmra.mxu0 %v645
    %v713 = vpop.f32.mrf.mxu0
    %v714 = vadd.f32 0.0, %v713
    %v715 = vpop.f32.mrf.mxu0
    %716 = vdwg.mxu0
    %v717 = vadd.f32 %v167, %v714
    %v718 = vxor.u32 %v717, 2147483648
    %v719 = vmul.f32 %v718, 1.442695
    %v720 = vpow.pop %v719
    %v721 = vadd.f32 %v720, 1.0
    %v722 = vrcp.pop %v721
    %v723 = vmul.f32 1.0, %v722
    %v724 = vtanh.pop %v717
    %v726 = vrot.slane %v633, 6
    %727 = vrot.lane.b32.xlu0 %v726, 32
    %v728 = vpop.permute.xlu0 %727
    %v730 = vmul.f32 %v723, %v728
    %732 = vrot.lane.b32.xlu0 %v724, 32
    %v733 = vpop.permute.xlu0 %732
    %v735 = vmul.f32 %v723, %v733
    %737 = vrot.lane.b32.xlu0 %v735, 32
    %v738 = vpop.permute.xlu0 %737
    %v740 = vadd.f32 %v730, %v738
    %v741 = vtanh.pop %v740
    %743 = vrot.lane.b32.xlu0 %v741, 32
    %v744 = vpop.permute.xlu0 %743
    %v746 = vmul.f32 %v723, %v744
    %748 = vrot.lane.b32.xlu0 %v740, 96
    %v749 = vpop.permute.xlu0 %748
    %v752 = vsel %vm642, %v749, %v726
    %754 = vrot.lane.b32.xlu0 %v746, 64
    %v755 = vpop.permute.xlu0 %754
    %v758 = vsel %vm642, %v755, %v644
    %v759 = vsel %vm642, %v755, 0.0
    %v761 = vsel %vm171, %v758, 0
    %763 = vmatprep.subr.mxu0 0.0
    %764 = vmatpush1.msra.mxu0 0.0
    %765 = vmatprep.subr.mxu0 0.0
    %766 = vmatpush1.msra.mxu0 0.0
    %767 = vmatprep.subr.mxu0 0.0
    %768 = vmatpush1.msra.mxu0 0.0
    %769 = vmatprep.subr.mxu0 0.0
    %770 = vmatpush1.msra.mxu0 0.0
    %771 = vmatprep.subr.mxu0 0.0
    %772 = vmatpush1.msra.mxu0 0.0
    %773 = vmatprep.subr.mxu0 0.0
    %774 = vmatpush1.msra.mxu0 0.0
    %775 = vmatprep.subr.mxu0 0.0
    %776 = vmatpush1.msra.mxu0 0.0
    %777 = vmatprep.subr.mxu0 0.0
    %778 = vmatpush1.msra.mxu0 0.0
    %779 = vmatprep.subr.mxu0 0.0
    %780 = vmatpush1.msra.mxu0 0.0
    %781 = vmatprep.subr.mxu0 0.0
    %782 = vmatpush1.msra.mxu0 0.0
    %783 = vmatprep.subr.mxu0 0.0
    %784 = vmatpush1.msra.mxu0 0.0
    %785 = vmatprep.subr.mxu0 0.0
    %786 = vmatpush1.msra.mxu0 0.0
    %787 = vmatprep.subr.mxu0 0.0
    %788 = vmatpush1.msra.mxu0 %v47
    %789 = vmatprep.subr.mxu0 0.0
    %790 = vmatpush1.msra.mxu0 %v46
    %791 = vmatprep.subr.mxu0 0.0
    %792 = vmatpush1.msra.mxu0 %v45
    %793 = vmatprep.subr.mxu0 0.0
    %794 = vmatpush1.msra.mxu0 %v44
    %795 = vmatprep.subr.mxu0 0.0
    %796 = vmatpush2.msra.mxu0 0.0
    %797 = vmatprep.subr.mxu0 0.0
    %798 = vmatpush2.msra.mxu0 0.0
    %799 = vmatprep.subr.mxu0 0.0
    %800 = vmatpush2.msra.mxu0 0.0
    %801 = vmatprep.subr.mxu0 0.0
    %802 = vmatpush2.msra.mxu0 0.0
    %803 = vmatprep.subr.mxu0 0.0
    %804 = vmatpush2.msra.mxu0 0.0
    %805 = vmatprep.subr.mxu0 0.0
    %806 = vmatpush2.msra.mxu0 0.0
    %807 = vmatprep.subr.mxu0 0.0
    %808 = vmatpush2.msra.mxu0 0.0
    %809 = vmatprep.subr.mxu0 0.0
    %810 = vmatpush2.msra.mxu0 0.0
    %811 = vmatprep.subr.mxu0 0.0
    %812 = vmatpush2.msra.mxu0 0.0
    %813 = vmatprep.subr.mxu0 0.0
    %814 = vmatpush2.msra.mxu0 0.0
    %815 = vmatprep.subr.mxu0 0.0
    %816 = vmatpush2.msra.mxu0 0.0
    %817 = vmatprep.subr.mxu0 0.0
    %818 = vmatpush2.msra.mxu0 0.0
    %819 = vmatprep.subr.mxu0 0.0
    %820 = vmatpush2.msra.mxu0 0.0
    %821 = vmatprep.subr.mxu0 0.0
    %822 = vmatpush2.msra.mxu0 0.0
    %823 = vmatprep.subr.mxu0 0.0
    %824 = vmatpush2.msra.mxu0 0.0
    %825 = vmatprep.subr.mxu0 0.0
    %826 = vmatpush2.msra.mxu0 0.0
    %827 = vmatprep.mubr.f32.mxu0 0.0
    %828 = vmatmul.mubr.f32.gmra.mxu0 %v761
    %v829 = vpop.f32.mrf.mxu0
    %v830 = vadd.f32 0.0, %v829
    %v831 = vpop.f32.mrf.mxu0
    %832 = vdwg.mxu0
    %v834 = vrot.slane %v830, 6
    %v836 = vadd.f32 %v167, %v834
    %v837 = vxor.u32 %v836, 2147483648
    %v838 = vmul.f32 %v837, 1.442695
    %v839 = vpow.pop %v838
    %v840 = vadd.f32 %v839, 1.0
    %v841 = vrcp.pop %v840
    %v842 = vmul.f32 1.0, %v841
    %v843 = vtanh.pop %v836
    %v845 = vrot.slane %v752, 6
    %846 = vrot.lane.b32.xlu0 %v845, 32
    %v847 = vpop.permute.xlu0 %846
    %v849 = vmul.f32 %v842, %v847
    %851 = vrot.lane.b32.xlu0 %v843, 32
    %v852 = vpop.permute.xlu0 %851
    %v854 = vmul.f32 %v842, %v852
    %856 = vrot.lane.b32.xlu0 %v854, 32
    %v857 = vpop.permute.xlu0 %856
    %v859 = vadd.f32 %v849, %v857
    %v860 = vtanh.pop %v859
    %862 = vrot.lane.b32.xlu0 %v860, 32
    %v863 = vpop.permute.xlu0 %862
    %v865 = vmul.f32 %v842, %v863
    %867 = vrot.lane.b32.xlu0 %v859, 96
    %v868 = vpop.permute.xlu0 %867
    %v871 = vsel %vm642, %v868, %v845
    %873 = vrot.lane.b32.xlu0 %v865, 64
    %v874 = vpop.permute.xlu0 %873
    %v876 = vrot.slane %v758, 6
    %v878 = vsel %vm642, %v874, %v876
    %v879 = vsel %vm642, %v874, 0.0
    %v881 = vrot.slane %v878, 2
    %v882 = vsel %vm171, %v881, 0
    %884 = vmatprep.subr.mxu0 0.0
    %885 = vmatpush1.msra.mxu0 0.0
    %886 = vmatprep.subr.mxu0 0.0
    %887 = vmatpush1.msra.mxu0 0.0
    %888 = vmatprep.subr.mxu0 0.0
    %889 = vmatpush1.msra.mxu0 0.0
    %890 = vmatprep.subr.mxu0 0.0
    %891 = vmatpush1.msra.mxu0 0.0
    %892 = vmatprep.subr.mxu0 0.0
    %893 = vmatpush1.msra.mxu0 0.0
    %894 = vmatprep.subr.mxu0 0.0
    %895 = vmatpush1.msra.mxu0 0.0
    %896 = vmatprep.subr.mxu0 0.0
    %897 = vmatpush1.msra.mxu0 0.0
    %898 = vmatprep.subr.mxu0 0.0
    %899 = vmatpush1.msra.mxu0 0.0
    %900 = vmatprep.subr.mxu0 0.0
    %901 = vmatpush1.msra.mxu0 0.0
    %902 = vmatprep.subr.mxu0 0.0
    %903 = vmatpush1.msra.mxu0 0.0
    %904 = vmatprep.subr.mxu0 0.0
    %905 = vmatpush1.msra.mxu0 0.0
    %906 = vmatprep.subr.mxu0 0.0
    %907 = vmatpush1.msra.mxu0 0.0
    %908 = vmatprep.subr.mxu0 0.0
    %909 = vmatpush1.msra.mxu0 %v47
    %910 = vmatprep.subr.mxu0 0.0
    %911 = vmatpush1.msra.mxu0 %v46
    %912 = vmatprep.subr.mxu0 0.0
    %913 = vmatpush1.msra.mxu0 %v45
    %914 = vmatprep.subr.mxu0 0.0
    %915 = vmatpush1.msra.mxu0 %v44
    %916 = vmatprep.subr.mxu0 0.0
    %917 = vmatpush2.msra.mxu0 0.0
    %918 = vmatprep.subr.mxu0 0.0
    %919 = vmatpush2.msra.mxu0 0.0
    %920 = vmatprep.subr.mxu0 0.0
    %921 = vmatpush2.msra.mxu0 0.0
    %922 = vmatprep.subr.mxu0 0.0
    %923 = vmatpush2.msra.mxu0 0.0
    %924 = vmatprep.subr.mxu0 0.0
    %925 = vmatpush2.msra.mxu0 0.0
    %926 = vmatprep.subr.mxu0 0.0
    %927 = vmatpush2.msra.mxu0 0.0
    %928 = vmatprep.subr.mxu0 0.0
    %929 = vmatpush2.msra.mxu0 0.0
    %930 = vmatprep.subr.mxu0 0.0
    %931 = vmatpush2.msra.mxu0 0.0
    %932 = vmatprep.subr.mxu0 0.0
    %933 = vmatpush2.msra.mxu0 0.0
    %934 = vmatprep.subr.mxu0 0.0
    %935 = vmatpush2.msra.mxu0 0.0
    %936 = vmatprep.subr.mxu0 0.0
    %937 = vmatpush2.msra.mxu0 0.0
    %938 = vmatprep.subr.mxu0 0.0
    %939 = vmatpush2.msra.mxu0 0.0
    %940 = vmatprep.subr.mxu0 0.0
    %941 = vmatpush2.msra.mxu0 0.0
    %942 = vmatprep.subr.mxu0 0.0
    %943 = vmatpush2.msra.mxu0 0.0
    %944 = vmatprep.subr.mxu0 0.0
    %945 = vmatpush2.msra.mxu0 0.0
    %946 = vmatprep.subr.mxu0 0.0
    %947 = vmatpush2.msra.mxu0 0.0
    %948 = vmatprep.mubr.f32.mxu0 0.0
    %949 = vmatmul.mubr.f32.gmra.mxu0 %v882
    %v950 = vpop.f32.mrf.mxu0
    %v951 = vadd.f32 0.0, %v950
    %v952 = vpop.f32.mrf.mxu0
    %953 = vdwg.mxu0
    %v955 = vrot.slane %v951, 4
    %v957 = vadd.f32 %v167, %v955
    %v958 = vxor.u32 %v957, 2147483648
    %v959 = vmul.f32 %v958, 1.442695
    %v960 = vpow.pop %v959
    %v961 = vadd.f32 %v960, 1.0
    %v962 = vrcp.pop %v961
    %v963 = vmul.f32 1.0, %v962
    %v964 = vtanh.pop %v957
    %v966 = vrot.slane %v871, 6
    %967 = vrot.lane.b32.xlu0 %v966, 32
    %v968 = vpop.permute.xlu0 %967
    %v970 = vmul.f32 %v963, %v968
    %972 = vrot.lane.b32.xlu0 %v964, 32
    %v973 = vpop.permute.xlu0 %972
    %v975 = vmul.f32 %v963, %v973
    %977 = vrot.lane.b32.xlu0 %v975, 32
    %v978 = vpop.permute.xlu0 %977
    %v980 = vadd.f32 %v970, %v978
    %v981 = vtanh.pop %v980
    %983 = vrot.lane.b32.xlu0 %v981, 32
    %v984 = vpop.permute.xlu0 %983
    %v986 = vmul.f32 %v963, %v984
    %988 = vrot.lane.b32.xlu0 %v980, 96
    %v989 = vpop.permute.xlu0 %988
    %v992 = vsel %vm642, %v989, %v966
    %994 = vrot.lane.b32.xlu0 %v986, 64
    %v995 = vpop.permute.xlu0 %994
    %v997 = vrot.slane %v878, 6
    %v999 = vsel %vm642, %v995, %v997
    %v1000 = vsel %vm642, %v995, 0.0
    %v1002 = vrot.slane %v999, 4
    %v1003 = vsel %vm171, %v1002, 0
    %1005 = vmatprep.subr.mxu0 0.0
    %1006 = vmatpush1.msra.mxu0 0.0
    %1007 = vmatprep.subr.mxu0 0.0
    %1008 = vmatpush1.msra.mxu0 0.0
    %1009 = vmatprep.subr.mxu0 0.0
    %1010 = vmatpush1.msra.mxu0 0.0
    %1011 = vmatprep.subr.mxu0 0.0
    %1012 = vmatpush1.msra.mxu0 0.0
    %1013 = vmatprep.subr.mxu0 0.0
    %1014 = vmatpush1.msra.mxu0 0.0
    %1015 = vmatprep.subr.mxu0 0.0
    %1016 = vmatpush1.msra.mxu0 0.0
    %1017 = vmatprep.subr.mxu0 0.0
    %1018 = vmatpush1.msra.mxu0 0.0
    %1019 = vmatprep.subr.mxu0 0.0
    %1020 = vmatpush1.msra.mxu0 0.0
    %1021 = vmatprep.subr.mxu0 0.0
    %1022 = vmatpush1.msra.mxu0 0.0
    %1023 = vmatprep.subr.mxu0 0.0
    %1024 = vmatpush1.msra.mxu0 0.0
    %1025 = vmatprep.subr.mxu0 0.0
    %1026 = vmatpush1.msra.mxu0 0.0
    %1027 = vmatprep.subr.mxu0 0.0
    %1028 = vmatpush1.msra.mxu0 0.0
    %1029 = vmatprep.subr.mxu0 0.0
    %1030 = vmatpush1.msra.mxu0 %v47
    %1031 = vmatprep.subr.mxu0 0.0
    %1032 = vmatpush1.msra.mxu0 %v46
    %1033 = vmatprep.subr.mxu0 0.0
    %1034 = vmatpush1.msra.mxu0 %v45
    %1035 = vmatprep.subr.mxu0 0.0
    %1036 = vmatpush1.msra.mxu0 %v44
    %1037 = vmatprep.subr.mxu0 0.0
    %1038 = vmatpush2.msra.mxu0 0.0
    %1039 = vmatprep.subr.mxu0 0.0
    %1040 = vmatpush2.msra.mxu0 0.0
    %1041 = vmatprep.subr.mxu0 0.0
    %1042 = vmatpush2.msra.mxu0 0.0
    %1043 = vmatprep.subr.mxu0 0.0
    %1044 = vmatpush2.msra.mxu0 0.0
    %1045 = vmatprep.subr.mxu0 0.0
    %1046 = vmatpush2.msra.mxu0 0.0
    %1047 = vmatprep.subr.mxu0 0.0
    %1048 = vmatpush2.msra.mxu0 0.0
    %1049 = vmatprep.subr.mxu0 0.0
    %1050 = vmatpush2.msra.mxu0 0.0
    %1051 = vmatprep.subr.mxu0 0.0
    %1052 = vmatpush2.msra.mxu0 0.0
    %1053 = vmatprep.subr.mxu0 0.0
    %1054 = vmatpush2.msra.mxu0 0.0
    %1055 = vmatprep.subr.mxu0 0.0
    %1056 = vmatpush2.msra.mxu0 0.0
    %1057 = vmatprep.subr.mxu0 0.0
    %1058 = vmatpush2.msra.mxu0 0.0
    %1059 = vmatprep.subr.mxu0 0.0
    %1060 = vmatpush2.msra.mxu0 0.0
    %1061 = vmatprep.subr.mxu0 0.0
    %1062 = vmatpush2.msra.mxu0 0.0
    %1063 = vmatprep.subr.mxu0 0.0
    %1064 = vmatpush2.msra.mxu0 0.0
    %1065 = vmatprep.subr.mxu0 0.0
    %1066 = vmatpush2.msra.mxu0 0.0
    %1067 = vmatprep.subr.mxu0 0.0
    %1068 = vmatpush2.msra.mxu0 0.0
    %1069 = vmatprep.mubr.f32.mxu0 0.0
    %1070 = vmatmul.mubr.f32.gmra.mxu0 %v1003
    %v1071 = vpop.f32.mrf.mxu0
    %v1072 = vadd.f32 0.0, %v1071
    %v1073 = vpop.f32.mrf.mxu0
    %1074 = vdwg.mxu0
    %v1076 = vrot.slane %v1072, 2
    %v1078 = vadd.f32 %v167, %v1076
    %v1079 = vxor.u32 %v1078, 2147483648
    %v1080 = vmul.f32 %v1079, 1.442695
    %v1081 = vpow.pop %v1080
    %v1082 = vadd.f32 %v1081, 1.0
    %v1083 = vrcp.pop %v1082
    %v1084 = vmul.f32 1.0, %v1083
    %v1085 = vtanh.pop %v1078
    %v1087 = vrot.slane %v992, 6
    %1088 = vrot.lane.b32.xlu0 %v1087, 32
    %v1089 = vpop.permute.xlu0 %1088
    %v1091 = vmul.f32 %v1084, %v1089
    %1093 = vrot.lane.b32.xlu0 %v1085, 32
    %v1094 = vpop.permute.xlu0 %1093
    %v1096 = vmul.f32 %v1084, %v1094
    %1098 = vrot.lane.b32.xlu0 %v1096, 32
    %v1099 = vpop.permute.xlu0 %1098
    %v1101 = vadd.f32 %v1091, %v1099
    %v1102 = vtanh.pop %v1101
    %1104 = vrot.lane.b32.xlu0 %v1102, 32
    %v1105 = vpop.permute.xlu0 %1104
    %v1107 = vmul.f32 %v1084, %v1105
    %1109 = vrot.lane.b32.xlu0 %v1107, 64
    %v1110 = vpop.permute.xlu0 %1109
    %v1112 = vsel %vm642, %v1110, 0.0
    %vm1113 = vcmask 1041408
    %v1114 = vsel %vm1113, %v279, %v399
    %vm1115 = vcmask 1043456
    %v1116 = vsel %vm1115, %v1114, %v520
    %vm1117 = vcmask 1045504
    %v1118 = vsel %vm1117, %v1116, %v641
    %v1119 = vsel %vm1113, %v759, %v879
    %v1120 = vsel %vm1115, %v1119, %v1000
    %v1121 = vsel %vm1117, %v1120, %v1112
    %v1123 = vrot.slane %v1112, 6
    %v1126 = vrot.slane %v1000, 2
    %v1129 = vrot.slane %v879, 6
    %v1132 = vrot.slane %v759, 2
    %v1135 = vrot.slane %v641, 6
    %v1138 = vrot.slane %v520, 2
    %v1141 = vrot.slane %v399, 6
    %v1143 = vrot.slane %v279, 2
    %v1145 = vsel %vm1113, %v1123, %v1126
    %v1146 = vsel %vm1115, %v1145, %v1129
    %v1147 = vsel %vm1117, %v1146, %v1132
    %v1148 = vsel %vm1113, %v1135, %v1138
    %v1149 = vsel %vm1115, %v1148, %v1141
    %v1150 = vsel %vm1117, %v1149, %v1143
    %1153 = vrot.lane.b32.xlu0 %v1147, 32
    %v1154 = vpop.permute.xlu0 %1153
    %1155 = vrot.lane.b32.xlu0 %v1150, 32
    %v1156 = vpop.permute.xlu0 %1155
    %v1159 = vsel %vm171, %v1118, %v1154
    %v1160 = vsel %vm171, %v1121, %v1156
    %v1161 = vld [vmem:[%s5] sm:$0xff]
    %v1162 = vld [vmem:[%s5 + $0x8] sm:$0xff]
    %v1163 = vld [vmem:[%s5 + $0x10] sm:$0xff]
    %v1164 = vld [vmem:[%s5 + $0x18] sm:$0xff]
    %v1165 = vld [vmem:[%s5 + $0x20] sm:$0xff]
    %v1166 = vld [vmem:[%s5 + $0x28] sm:$0xff]
    %v1167 = vld [vmem:[%s5 + $0x30] sm:$0xff]
    %v1168 = vld [vmem:[%s5 + $0x38] sm:$0xff]
    %v1169 = vld [vmem:[%s6] sm:$0x1]
    %v1171 = vlaneseq
    %v1172 = vshrl.u32 %v1171, 7
    %v1173 = vsub.s32 0, %v1172
    %v1174 = vrot.slane %v1169, %v1173
    %v1177 = vsel %vm88, %v1159, 0
    %v1180 = vsel %vm88, %v1160, 0
    %1182 = vmatprep.subr.mxu0 0.0
    %1183 = vmatpush1.msra.mxu0 0.0
    %1184 = vmatprep.subr.mxu0 0.0
    %1185 = vmatpush1.msra.mxu0 0.0
    %1186 = vmatprep.subr.mxu0 0.0
    %1187 = vmatpush1.msra.mxu0 0.0
    %1188 = vmatprep.subr.mxu0 0.0
    %1189 = vmatpush1.msra.mxu0 0.0
    %1190 = vmatprep.subr.mxu0 0.0
    %1191 = vmatpush1.msra.mxu0 0.0
    %1192 = vmatprep.subr.mxu0 0.0
    %1193 = vmatpush1.msra.mxu0 0.0
    %1194 = vmatprep.subr.mxu0 0.0
    %1195 = vmatpush1.msra.mxu0 0.0
    %1196 = vmatprep.subr.mxu0 0.0
    %1197 = vmatpush1.msra.mxu0 0.0
    %1198 = vmatprep.subr.mxu0 0.0
    %1199 = vmatpush1.msra.mxu0 %v1168
    %1200 = vmatprep.subr.mxu0 0.0
    %1201 = vmatpush1.msra.mxu0 %v1167
    %1202 = vmatprep.subr.mxu0 0.0
    %1203 = vmatpush1.msra.mxu0 %v1166
    %1204 = vmatprep.subr.mxu0 0.0
    %1205 = vmatpush1.msra.mxu0 %v1165
    %1206 = vmatprep.subr.mxu0 0.0
    %1207 = vmatpush1.msra.mxu0 %v1164
    %1208 = vmatprep.subr.mxu0 0.0
    %1209 = vmatpush1.msra.mxu0 %v1163
    %1210 = vmatprep.subr.mxu0 0.0
    %1211 = vmatpush1.msra.mxu0 %v1162
    %1212 = vmatprep.subr.mxu0 0.0
    %1213 = vmatpush1.msra.mxu0 %v1161
    %1214 = vmatprep.subr.mxu0 0.0
    %1215 = vmatpush2.msra.mxu0 0.0
    %1216 = vmatprep.subr.mxu0 0.0
    %1217 = vmatpush2.msra.mxu0 0.0
    %1218 = vmatprep.subr.mxu0 0.0
    %1219 = vmatpush2.msra.mxu0 0.0
    %1220 = vmatprep.subr.mxu0 0.0
    %1221 = vmatpush2.msra.mxu0 0.0
    %1222 = vmatprep.subr.mxu0 0.0
    %1223 = vmatpush2.msra.mxu0 0.0
    %1224 = vmatprep.subr.mxu0 0.0
    %1225 = vmatpush2.msra.mxu0 0.0
    %1226 = vmatprep.subr.mxu0 0.0
    %1227 = vmatpush2.msra.mxu0 0.0
    %1228 = vmatprep.subr.mxu0 0.0
    %1229 = vmatpush2.msra.mxu0 0.0
    %1230 = vmatprep.subr.mxu0 0.0
    %1231 = vmatpush2.msra.mxu0 0.0
    %1232 = vmatprep.subr.mxu0 0.0
    %1233 = vmatpush2.msra.mxu0 0.0
    %1234 = vmatprep.subr.mxu0 0.0
    %1235 = vmatpush2.msra.mxu0 0.0
    %1236 = vmatprep.subr.mxu0 0.0
    %1237 = vmatpush2.msra.mxu0 0.0
    %1238 = vmatprep.subr.mxu0 0.0
    %1239 = vmatpush2.msra.mxu0 0.0
    %1240 = vmatprep.subr.mxu0 0.0
    %1241 = vmatpush2.msra.mxu0 0.0
    %1242 = vmatprep.subr.mxu0 0.0
    %1243 = vmatpush2.msra.mxu0 0.0
    %1244 = vmatprep.subr.mxu0 0.0
    %1245 = vmatpush2.msra.mxu0 0.0
    %1246 = vmatprep.mubr.f32.mxu0 0.0
    %1247 = vmatmul.mubr.f32.gmra.mxu0 %v1177
    %v1248 = vpop.f32.mrf.mxu0
    %v1249 = vadd.f32 %v1174, %v1248
    %v1250 = vpop.f32.mrf.mxu0
    %1251 = vmatprep.mubr.f32.mxu0 0.0
    %1252 = vmatmul.mubr.f32.gmra.mxu0 %v1180
    %v1253 = vpop.f32.mrf.mxu0
    %v1254 = vadd.f32 %v1174, %v1253
    %v1255 = vpop.f32.mrf.mxu0
    %1256 = vdwg.mxu0
    %1257 = vmatprep.subr.mxu0 0.0
    %1258 = vmatpush1.msra.mxu0 0.0
    %1259 = vmatprep.subr.mxu0 0.0
    %1260 = vmatpush1.msra.mxu0 0.0
    %1261 = vmatprep.subr.mxu0 0.0
    %1262 = vmatpush1.msra.mxu0 0.0
    %1263 = vmatprep.subr.mxu0 0.0
    %1264 = vmatpush1.msra.mxu0 0.0
    %1265 = vmatprep.subr.mxu0 0.0
    %1266 = vmatpush1.msra.mxu0 0.0
    %1267 = vmatprep.subr.mxu0 0.0
    %1268 = vmatpush1.msra.mxu0 0.0
    %1269 = vmatprep.subr.mxu0 0.0
    %1270 = vmatpush1.msra.mxu0 0.0
    %1271 = vmatprep.subr.mxu0 0.0
    %1272 = vmatpush1.msra.mxu0 0.0
    %1273 = vmatprep.subr.mxu0 0.0
    %1274 = vmatpush1.msra.mxu0 0.0
    %1275 = vmatprep.subr.mxu0 0.0
    %1276 = vmatpush1.msra.mxu0 0.0
    %1277 = vmatprep.subr.mxu0 0.0
    %1278 = vmatpush1.msra.mxu0 0.0
    %1279 = vmatprep.subr.mxu0 0.0
    %1280 = vmatpush1.msra.mxu0 0.0
    %1281 = vmatprep.subr.mxu0 0.0
    %1282 = vmatpush1.msra.mxu0 %v51
    %1283 = vmatprep.subr.mxu0 0.0
    %1284 = vmatpush1.msra.mxu0 %v50
    %1285 = vmatprep.subr.mxu0 0.0
    %1286 = vmatpush1.msra.mxu0 %v49
    %1287 = vmatprep.subr.mxu0 0.0
    %1288 = vmatpush1.msra.mxu0 %v48
    %1289 = vmatprep.subr.mxu0 0.0
    %1290 = vmatpush2.msra.mxu0 0.0
    %1291 = vmatprep.subr.mxu0 0.0
    %1292 = vmatpush2.msra.mxu0 0.0
    %1293 = vmatprep.subr.mxu0 0.0
    %1294 = vmatpush2.msra.mxu0 0.0
    %1295 = vmatprep.subr.mxu0 0.0
    %1296 = vmatpush2.msra.mxu0 0.0
    %1297 = vmatprep.subr.mxu0 0.0
    %1298 = vmatpush2.msra.mxu0 0.0
    %1299 = vmatprep.subr.mxu0 0.0
    %1300 = vmatpush2.msra.mxu0 0.0
    %1301 = vmatprep.subr.mxu0 0.0
    %1302 = vmatpush2.msra.mxu0 0.0
    %1303 = vmatprep.subr.mxu0 0.0
    %1304 = vmatpush2.msra.mxu0 0.0
    %1305 = vmatprep.subr.mxu0 0.0
    %1306 = vmatpush2.msra.mxu0 0.0
    %1307 = vmatprep.subr.mxu0 0.0
    %1308 = vmatpush2.msra.mxu0 0.0
    %1309 = vmatprep.subr.mxu0 0.0
    %1310 = vmatpush2.msra.mxu0 0.0
    %1311 = vmatprep.subr.mxu0 0.0
    %1312 = vmatpush2.msra.mxu0 0.0
    %1313 = vmatprep.subr.mxu0 0.0
    %1314 = vmatpush2.msra.mxu0 0.0
    %1315 = vmatprep.subr.mxu0 0.0
    %1316 = vmatpush2.msra.mxu0 0.0
    %1317 = vmatprep.subr.mxu0 0.0
    %1318 = vmatpush2.msra.mxu0 0.0
    %1319 = vmatprep.subr.mxu0 0.0
    %1320 = vmatpush2.msra.mxu0 0.0
    %1321 = vmatprep.mubr.f32.mxu0 0.0
    %1322 = vmatmul.mubr.f32.gmra.mxu0 %v173
    %v1323 = vpop.f32.mrf.mxu0
    %v1324 = vadd.f32 0.0, %v1323
    %v1325 = vpop.f32.mrf.mxu0
    %1326 = vdwg.mxu0
    %v1327 = vadd.f32 %v1249, %v1324
    %v1328 = vxor.u32 %v1327, 2147483648
    %v1329 = vmul.f32 %v1328, 1.442695
    %v1330 = vpow.pop %v1329
    %v1331 = vadd.f32 %v1330, 1.0
    %v1332 = vrcp.pop %v1331
    %v1333 = vmul.f32 1.0, %v1332
    %v1334 = vtanh.pop %v1327
    %v1335 = vmul.f32 %v1333, 0.0
    %1337 = vrot.lane.b32.xlu0 %v1334, 32
    %v1338 = vpop.permute.xlu0 %1337
    %v1340 = vmul.f32 %v1333, %v1338
    %1342 = vrot.lane.b32.xlu0 %v1340, 32
    %v1343 = vpop.permute.xlu0 %1342
    %v1345 = vadd.f32 %v1335, %v1343
    %v1346 = vtanh.pop %v1345
    %1348 = vrot.lane.b32.xlu0 %v1346, 32
    %v1349 = vpop.permute.xlu0 %1348
    %v1351 = vmul.f32 %v1333, %v1349
    %1353 = vrot.lane.b32.xlu0 %v1345, 96
    %v1354 = vpop.permute.xlu0 %1353
    %v1356 = vsel %vm170, %v1354, 0.0
    %1358 = vrot.lane.b32.xlu0 %v1351, 64
    %v1359 = vpop.permute.xlu0 %1358
    %v1361 = vsel %vm170, %v1359, 0.0
    %v1363 = vsel %vm171, %v1361, 0
    %1365 = vmatprep.subr.mxu0 0.0
    %1366 = vmatpush1.msra.mxu0 0.0
    %1367 = vmatprep.subr.mxu0 0.0
    %1368 = vmatpush1.msra.mxu0 0.0
    %1369 = vmatprep.subr.mxu0 0.0
    %1370 = vmatpush1.msra.mxu0 0.0
    %1371 = vmatprep.subr.mxu0 0.0
    %1372 = vmatpush1.msra.mxu0 0.0
    %1373 = vmatprep.subr.mxu0 0.0
    %1374 = vmatpush1.msra.mxu0 0.0
    %1375 = vmatprep.subr.mxu0 0.0
    %1376 = vmatpush1.msra.mxu0 0.0
    %1377 = vmatprep.subr.mxu0 0.0
    %1378 = vmatpush1.msra.mxu0 0.0
    %1379 = vmatprep.subr.mxu0 0.0
    %1380 = vmatpush1.msra.mxu0 0.0
    %1381 = vmatprep.subr.mxu0 0.0
    %1382 = vmatpush1.msra.mxu0 0.0
    %1383 = vmatprep.subr.mxu0 0.0
    %1384 = vmatpush1.msra.mxu0 0.0
    %1385 = vmatprep.subr.mxu0 0.0
    %1386 = vmatpush1.msra.mxu0 0.0
    %1387 = vmatprep.subr.mxu0 0.0
    %1388 = vmatpush1.msra.mxu0 0.0
    %1389 = vmatprep.subr.mxu0 0.0
    %1390 = vmatpush1.msra.mxu0 %v51
    %1391 = vmatprep.subr.mxu0 0.0
    %1392 = vmatpush1.msra.mxu0 %v50
    %1393 = vmatprep.subr.mxu0 0.0
    %1394 = vmatpush1.msra.mxu0 %v49
    %1395 = vmatprep.subr.mxu0 0.0
    %1396 = vmatpush1.msra.mxu0 %v48
    %1397 = vmatprep.subr.mxu0 0.0
    %1398 = vmatpush2.msra.mxu0 0.0
    %1399 = vmatprep.subr.mxu0 0.0
    %1400 = vmatpush2.msra.mxu0 0.0
    %1401 = vmatprep.subr.mxu0 0.0
    %1402 = vmatpush2.msra.mxu0 0.0
    %1403 = vmatprep.subr.mxu0 0.0
    %1404 = vmatpush2.msra.mxu0 0.0
    %1405 = vmatprep.subr.mxu0 0.0
    %1406 = vmatpush2.msra.mxu0 0.0
    %1407 = vmatprep.subr.mxu0 0.0
    %1408 = vmatpush2.msra.mxu0 0.0
    %1409 = vmatprep.subr.mxu0 0.0
    %1410 = vmatpush2.msra.mxu0 0.0
    %1411 = vmatprep.subr.mxu0 0.0
    %1412 = vmatpush2.msra.mxu0 0.0
    %1413 = vmatprep.subr.mxu0 0.0
    %1414 = vmatpush2.msra.mxu0 0.0
    %1415 = vmatprep.subr.mxu0 0.0
    %1416 = vmatpush2.msra.mxu0 0.0
    %1417 = vmatprep.subr.mxu0 0.0
    %1418 = vmatpush2.msra.mxu0 0.0
    %1419 = vmatprep.subr.mxu0 0.0
    %1420 = vmatpush2.msra.mxu0 0.0
    %1421 = vmatprep.subr.mxu0 0.0
    %1422 = vmatpush2.msra.mxu0 0.0
    %1423 = vmatprep.subr.mxu0 0.0
    %1424 = vmatpush2.msra.mxu0 0.0
    %1425 = vmatprep.subr.mxu0 0.0
    %1426 = vmatpush2.msra.mxu0 0.0
    %1427 = vmatprep.subr.mxu0 0.0
    %1428 = vmatpush2.msra.mxu0 0.0
    %1429 = vmatprep.mubr.f32.mxu0 0.0
    %1430 = vmatmul.mubr.f32.gmra.mxu0 %v1363
    %v1431 = vpop.f32.mrf.mxu0
    %v1432 = vadd.f32 0.0, %v1431
    %v1433 = vpop.f32.mrf.mxu0
    %1434 = vdwg.mxu0
    %v1436 = vrot.slane %v1432, 6
    %v1438 = vadd.f32 %v1249, %v1436
    %v1439 = vxor.u32 %v1438, 2147483648
    %v1440 = vmul.f32 %v1439, 1.442695
    %v1441 = vpow.pop %v1440
    %v1442 = vadd.f32 %v1441, 1.0
    %v1443 = vrcp.pop %v1442
    %v1444 = vmul.f32 1.0, %v1443
    %v1445 = vtanh.pop %v1438
    %v1447 = vrot.slane %v1356, 6
    %1448 = vrot.lane.b32.xlu0 %v1447, 32
    %v1449 = vpop.permute.xlu0 %1448
    %v1451 = vmul.f32 %v1444, %v1449
    %1453 = vrot.lane.b32.xlu0 %v1445, 32
    %v1454 = vpop.permute.xlu0 %1453
    %v1456 = vmul.f32 %v1444, %v1454
    %1458 = vrot.lane.b32.xlu0 %v1456, 32
    %v1459 = vpop.permute.xlu0 %1458
    %v1461 = vadd.f32 %v1451, %v1459
    %v1462 = vtanh.pop %v1461
    %1464 = vrot.lane.b32.xlu0 %v1462, 32
    %v1465 = vpop.permute.xlu0 %1464
    %v1467 = vmul.f32 %v1444, %v1465
    %1469 = vrot.lane.b32.xlu0 %v1461, 96
    %v1470 = vpop.permute.xlu0 %1469
    %v1473 = vsel %vm170, %v1470, %v1447
    %1475 = vrot.lane.b32.xlu0 %v1467, 64
    %v1476 = vpop.permute.xlu0 %1475
    %v1478 = vrot.slane %v1361, 6
    %v1480 = vsel %vm170, %v1476, %v1478
    %v1481 = vsel %vm170, %v1476, 0.0
    %v1483 = vrot.slane %v1480, 2
    %v1484 = vsel %vm171, %v1483, 0
    %1486 = vmatprep.subr.mxu0 0.0
    %1487 = vmatpush1.msra.mxu0 0.0
    %1488 = vmatprep.subr.mxu0 0.0
    %1489 = vmatpush1.msra.mxu0 0.0
    %1490 = vmatprep.subr.mxu0 0.0
    %1491 = vmatpush1.msra.mxu0 0.0
    %1492 = vmatprep.subr.mxu0 0.0
    %1493 = vmatpush1.msra.mxu0 0.0
    %1494 = vmatprep.subr.mxu0 0.0
    %1495 = vmatpush1.msra.mxu0 0.0
    %1496 = vmatprep.subr.mxu0 0.0
    %1497 = vmatpush1.msra.mxu0 0.0
    %1498 = vmatprep.subr.mxu0 0.0
    %1499 = vmatpush1.msra.mxu0 0.0
    %1500 = vmatprep.subr.mxu0 0.0
    %1501 = vmatpush1.msra.mxu0 0.0
    %1502 = vmatprep.subr.mxu0 0.0
    %1503 = vmatpush1.msra.mxu0 0.0
    %1504 = vmatprep.subr.mxu0 0.0
    %1505 = vmatpush1.msra.mxu0 0.0
    %1506 = vmatprep.subr.mxu0 0.0
    %1507 = vmatpush1.msra.mxu0 0.0
    %1508 = vmatprep.subr.mxu0 0.0
    %1509 = vmatpush1.msra.mxu0 0.0
    %1510 = vmatprep.subr.mxu0 0.0
    %1511 = vmatpush1.msra.mxu0 %v51
    %1512 = vmatprep.subr.mxu0 0.0
    %1513 = vmatpush1.msra.mxu0 %v50
    %1514 = vmatprep.subr.mxu0 0.0
    %1515 = vmatpush1.msra.mxu0 %v49
    %1516 = vmatprep.subr.mxu0 0.0
    %1517 = vmatpush1.msra.mxu0 %v48
    %1518 = vmatprep.subr.mxu0 0.0
    %1519 = vmatpush2.msra.mxu0 0.0
    %1520 = vmatprep.subr.mxu0 0.0
    %1521 = vmatpush2.msra.mxu0 0.0
    %1522 = vmatprep.subr.mxu0 0.0
    %1523 = vmatpush2.msra.mxu0 0.0
    %1524 = vmatprep.subr.mxu0 0.0
    %1525 = vmatpush2.msra.mxu0 0.0
    %1526 = vmatprep.subr.mxu0 0.0
    %1527 = vmatpush2.msra.mxu0 0.0
    %1528 = vmatprep.subr.mxu0 0.0
    %1529 = vmatpush2.msra.mxu0 0.0
    %1530 = vmatprep.subr.mxu0 0.0
    %1531 = vmatpush2.msra.mxu0 0.0
    %1532 = vmatprep.subr.mxu0 0.0
    %1533 = vmatpush2.msra.mxu0 0.0
    %1534 = vmatprep.subr.mxu0 0.0
    %1535 = vmatpush2.msra.mxu0 0.0
    %1536 = vmatprep.subr.mxu0 0.0
    %1537 = vmatpush2.msra.mxu0 0.0
    %1538 = vmatprep.subr.mxu0 0.0
    %1539 = vmatpush2.msra.mxu0 0.0
    %1540 = vmatprep.subr.mxu0 0.0
    %1541 = vmatpush2.msra.mxu0 0.0
    %1542 = vmatprep.subr.mxu0 0.0
    %1543 = vmatpush2.msra.mxu0 0.0
    %1544 = vmatprep.subr.mxu0 0.0
    %1545 = vmatpush2.msra.mxu0 0.0
    %1546 = vmatprep.subr.mxu0 0.0
    %1547 = vmatpush2.msra.mxu0 0.0
    %1548 = vmatprep.subr.mxu0 0.0
    %1549 = vmatpush2.msra.mxu0 0.0
    %1550 = vmatprep.mubr.f32.mxu0 0.0
    %1551 = vmatmul.mubr.f32.gmra.mxu0 %v1484
    %v1552 = vpop.f32.mrf.mxu0
    %v1553 = vadd.f32 0.0, %v1552
    %v1554 = vpop.f32.mrf.mxu0
    %1555 = vdwg.mxu0
    %v1557 = vrot.slane %v1553, 4
    %v1559 = vadd.f32 %v1249, %v1557
    %v1560 = vxor.u32 %v1559, 2147483648
    %v1561 = vmul.f32 %v1560, 1.442695
    %v1562 = vpow.pop %v1561
    %v1563 = vadd.f32 %v1562, 1.0
    %v1564 = vrcp.pop %v1563
    %v1565 = vmul.f32 1.0, %v1564
    %v1566 = vtanh.pop %v1559
    %v1568 = vrot.slane %v1473, 6
    %1569 = vrot.lane.b32.xlu0 %v1568, 32
    %v1570 = vpop.permute.xlu0 %1569
    %v1572 = vmul.f32 %v1565, %v1570
    %1574 = vrot.lane.b32.xlu0 %v1566, 32
    %v1575 = vpop.permute.xlu0 %1574
    %v1577 = vmul.f32 %v1565, %v1575
    %1579 = vrot.lane.b32.xlu0 %v1577, 32
    %v1580 = vpop.permute.xlu0 %1579
    %v1582 = vadd.f32 %v1572, %v1580
    %v1583 = vtanh.pop %v1582
    %1585 = vrot.lane.b32.xlu0 %v1583, 32
    %v1586 = vpop.permute.xlu0 %1585
    %v1588 = vmul.f32 %v1565, %v1586
    %1590 = vrot.lane.b32.xlu0 %v1582, 96
    %v1591 = vpop.permute.xlu0 %1590
    %v1594 = vsel %vm170, %v1591, %v1568
    %1596 = vrot.lane.b32.xlu0 %v1588, 64
    %v1597 = vpop.permute.xlu0 %1596
    %v1599 = vrot.slane %v1480, 6
    %v1601 = vsel %vm170, %v1597, %v1599
    %v1602 = vsel %vm170, %v1597, 0.0
    %v1604 = vrot.slane %v1601, 4
    %v1605 = vsel %vm171, %v1604, 0
    %1607 = vmatprep.subr.mxu0 0.0
    %1608 = vmatpush1.msra.mxu0 0.0
    %1609 = vmatprep.subr.mxu0 0.0
    %1610 = vmatpush1.msra.mxu0 0.0
    %1611 = vmatprep.subr.mxu0 0.0
    %1612 = vmatpush1.msra.mxu0 0.0
    %1613 = vmatprep.subr.mxu0 0.0
    %1614 = vmatpush1.msra.mxu0 0.0
    %1615 = vmatprep.subr.mxu0 0.0
    %1616 = vmatpush1.msra.mxu0 0.0
    %1617 = vmatprep.subr.mxu0 0.0
    %1618 = vmatpush1.msra.mxu0 0.0
    %1619 = vmatprep.subr.mxu0 0.0
    %1620 = vmatpush1.msra.mxu0 0.0
    %1621 = vmatprep.subr.mxu0 0.0
    %1622 = vmatpush1.msra.mxu0 0.0
    %1623 = vmatprep.subr.mxu0 0.0
    %1624 = vmatpush1.msra.mxu0 0.0
    %1625 = vmatprep.subr.mxu0 0.0
    %1626 = vmatpush1.msra.mxu0 0.0
    %1627 = vmatprep.subr.mxu0 0.0
    %1628 = vmatpush1.msra.mxu0 0.0
    %1629 = vmatprep.subr.mxu0 0.0
    %1630 = vmatpush1.msra.mxu0 0.0
    %1631 = vmatprep.subr.mxu0 0.0
    %1632 = vmatpush1.msra.mxu0 %v51
    %1633 = vmatprep.subr.mxu0 0.0
    %1634 = vmatpush1.msra.mxu0 %v50
    %1635 = vmatprep.subr.mxu0 0.0
    %1636 = vmatpush1.msra.mxu0 %v49
    %1637 = vmatprep.subr.mxu0 0.0
    %1638 = vmatpush1.msra.mxu0 %v48
    %1639 = vmatprep.subr.mxu0 0.0
    %1640 = vmatpush2.msra.mxu0 0.0
    %1641 = vmatprep.subr.mxu0 0.0
    %1642 = vmatpush2.msra.mxu0 0.0
    %1643 = vmatprep.subr.mxu0 0.0
    %1644 = vmatpush2.msra.mxu0 0.0
    %1645 = vmatprep.subr.mxu0 0.0
    %1646 = vmatpush2.msra.mxu0 0.0
    %1647 = vmatprep.subr.mxu0 0.0
    %1648 = vmatpush2.msra.mxu0 0.0
    %1649 = vmatprep.subr.mxu0 0.0
    %1650 = vmatpush2.msra.mxu0 0.0
    %1651 = vmatprep.subr.mxu0 0.0
    %1652 = vmatpush2.msra.mxu0 0.0
    %1653 = vmatprep.subr.mxu0 0.0
    %1654 = vmatpush2.msra.mxu0 0.0
    %1655 = vmatprep.subr.mxu0 0.0
    %1656 = vmatpush2.msra.mxu0 0.0
    %1657 = vmatprep.subr.mxu0 0.0
    %1658 = vmatpush2.msra.mxu0 0.0
    %1659 = vmatprep.subr.mxu0 0.0
    %1660 = vmatpush2.msra.mxu0 0.0
    %1661 = vmatprep.subr.mxu0 0.0
    %1662 = vmatpush2.msra.mxu0 0.0
    %1663 = vmatprep.subr.mxu0 0.0
    %1664 = vmatpush2.msra.mxu0 0.0
    %1665 = vmatprep.subr.mxu0 0.0
    %1666 = vmatpush2.msra.mxu0 0.0
    %1667 = vmatprep.subr.mxu0 0.0
    %1668 = vmatpush2.msra.mxu0 0.0
    %1669 = vmatprep.subr.mxu0 0.0
    %1670 = vmatpush2.msra.mxu0 0.0
    %1671 = vmatprep.mubr.f32.mxu0 0.0
    %1672 = vmatmul.mubr.f32.gmra.mxu0 %v1605
    %v1673 = vpop.f32.mrf.mxu0
    %v1674 = vadd.f32 0.0, %v1673
    %v1675 = vpop.f32.mrf.mxu0
    %1676 = vdwg.mxu0
    %v1678 = vrot.slane %v1674, 2
    %v1680 = vadd.f32 %v1249, %v1678
    %v1681 = vxor.u32 %v1680, 2147483648
    %v1682 = vmul.f32 %v1681, 1.442695
    %v1683 = vpow.pop %v1682
    %v1684 = vadd.f32 %v1683, 1.0
    %v1685 = vrcp.pop %v1684
    %v1686 = vmul.f32 1.0, %v1685
    %v1687 = vtanh.pop %v1680
    %v1689 = vrot.slane %v1594, 6
    %1690 = vrot.lane.b32.xlu0 %v1689, 32
    %v1691 = vpop.permute.xlu0 %1690
    %v1693 = vmul.f32 %v1686, %v1691
    %1695 = vrot.lane.b32.xlu0 %v1687, 32
    %v1696 = vpop.permute.xlu0 %1695
    %v1698 = vmul.f32 %v1686, %v1696
    %1700 = vrot.lane.b32.xlu0 %v1698, 32
    %v1701 = vpop.permute.xlu0 %1700
    %v1703 = vadd.f32 %v1693, %v1701
    %v1704 = vtanh.pop %v1703
    %1706 = vrot.lane.b32.xlu0 %v1704, 32
    %v1707 = vpop.permute.xlu0 %1706
    %v1709 = vmul.f32 %v1686, %v1707
    %1711 = vrot.lane.b32.xlu0 %v1703, 96
    %v1712 = vpop.permute.xlu0 %1711
    %v1715 = vsel %vm170, %v1712, %v1689
    %1717 = vrot.lane.b32.xlu0 %v1709, 64
    %v1718 = vpop.permute.xlu0 %1717
    %v1720 = vrot.slane %v1601, 6
    %v1722 = vsel %vm170, %v1718, %v1720
    %v1723 = vsel %vm170, %v1718, 0.0
    %v1725 = vrot.slane %v1722, 6
    %v1726 = vsel %vm171, %v1725, 0
    %1728 = vmatprep.subr.mxu0 0.0
    %1729 = vmatpush1.msra.mxu0 0.0
    %1730 = vmatprep.subr.mxu0 0.0
    %1731 = vmatpush1.msra.mxu0 0.0
    %1732 = vmatprep.subr.mxu0 0.0
    %1733 = vmatpush1.msra.mxu0 0.0
    %1734 = vmatprep.subr.mxu0 0.0
    %1735 = vmatpush1.msra.mxu0 0.0
    %1736 = vmatprep.subr.mxu0 0.0
    %1737 = vmatpush1.msra.mxu0 0.0
    %1738 = vmatprep.subr.mxu0 0.0
    %1739 = vmatpush1.msra.mxu0 0.0
    %1740 = vmatprep.subr.mxu0 0.0
    %1741 = vmatpush1.msra.mxu0 0.0
    %1742 = vmatprep.subr.mxu0 0.0
    %1743 = vmatpush1.msra.mxu0 0.0
    %1744 = vmatprep.subr.mxu0 0.0
    %1745 = vmatpush1.msra.mxu0 0.0
    %1746 = vmatprep.subr.mxu0 0.0
    %1747 = vmatpush1.msra.mxu0 0.0
    %1748 = vmatprep.subr.mxu0 0.0
    %1749 = vmatpush1.msra.mxu0 0.0
    %1750 = vmatprep.subr.mxu0 0.0
    %1751 = vmatpush1.msra.mxu0 0.0
    %1752 = vmatprep.subr.mxu0 0.0
    %1753 = vmatpush1.msra.mxu0 %v51
    %1754 = vmatprep.subr.mxu0 0.0
    %1755 = vmatpush1.msra.mxu0 %v50
    %1756 = vmatprep.subr.mxu0 0.0
    %1757 = vmatpush1.msra.mxu0 %v49
    %1758 = vmatprep.subr.mxu0 0.0
    %1759 = vmatpush1.msra.mxu0 %v48
    %1760 = vmatprep.subr.mxu0 0.0
    %1761 = vmatpush2.msra.mxu0 0.0
    %1762 = vmatprep.subr.mxu0 0.0
    %1763 = vmatpush2.msra.mxu0 0.0
    %1764 = vmatprep.subr.mxu0 0.0
    %1765 = vmatpush2.msra.mxu0 0.0
    %1766 = vmatprep.subr.mxu0 0.0
    %1767 = vmatpush2.msra.mxu0 0.0
    %1768 = vmatprep.subr.mxu0 0.0
    %1769 = vmatpush2.msra.mxu0 0.0
    %1770 = vmatprep.subr.mxu0 0.0
    %1771 = vmatpush2.msra.mxu0 0.0
    %1772 = vmatprep.subr.mxu0 0.0
    %1773 = vmatpush2.msra.mxu0 0.0
    %1774 = vmatprep.subr.mxu0 0.0
    %1775 = vmatpush2.msra.mxu0 0.0
    %1776 = vmatprep.subr.mxu0 0.0
    %1777 = vmatpush2.msra.mxu0 0.0
    %1778 = vmatprep.subr.mxu0 0.0
    %1779 = vmatpush2.msra.mxu0 0.0
    %1780 = vmatprep.subr.mxu0 0.0
    %1781 = vmatpush2.msra.mxu0 0.0
    %1782 = vmatprep.subr.mxu0 0.0
    %1783 = vmatpush2.msra.mxu0 0.0
    %1784 = vmatprep.subr.mxu0 0.0
    %1785 = vmatpush2.msra.mxu0 0.0
    %1786 = vmatprep.subr.mxu0 0.0
    %1787 = vmatpush2.msra.mxu0 0.0
    %1788 = vmatprep.subr.mxu0 0.0
    %1789 = vmatpush2.msra.mxu0 0.0
    %1790 = vmatprep.subr.mxu0 0.0
    %1791 = vmatpush2.msra.mxu0 0.0
    %1792 = vmatprep.mubr.f32.mxu0 0.0
    %1793 = vmatmul.mubr.f32.gmra.mxu0 %v1726
    %v1794 = vpop.f32.mrf.mxu0
    %v1795 = vadd.f32 0.0, %v1794
    %v1796 = vpop.f32.mrf.mxu0
    %1797 = vdwg.mxu0
    %v1798 = vadd.f32 %v1254, %v1795
    %v1799 = vxor.u32 %v1798, 2147483648
    %v1800 = vmul.f32 %v1799, 1.442695
    %v1801 = vpow.pop %v1800
    %v1802 = vadd.f32 %v1801, 1.0
    %v1803 = vrcp.pop %v1802
    %v1804 = vmul.f32 1.0, %v1803
    %v1805 = vtanh.pop %v1798
    %v1807 = vrot.slane %v1715, 6
    %1808 = vrot.lane.b32.xlu0 %v1807, 32
    %v1809 = vpop.permute.xlu0 %1808
    %v1811 = vmul.f32 %v1804, %v1809
    %1813 = vrot.lane.b32.xlu0 %v1805, 32
    %v1814 = vpop.permute.xlu0 %1813
    %v1816 = vmul.f32 %v1804, %v1814
    %1818 = vrot.lane.b32.xlu0 %v1816, 32
    %v1819 = vpop.permute.xlu0 %1818
    %v1821 = vadd.f32 %v1811, %v1819
    %v1822 = vtanh.pop %v1821
    %1824 = vrot.lane.b32.xlu0 %v1822, 32
    %v1825 = vpop.permute.xlu0 %1824
    %v1827 = vmul.f32 %v1804, %v1825
    %1829 = vrot.lane.b32.xlu0 %v1821, 96
    %v1830 = vpop.permute.xlu0 %1829
    %v1833 = vsel %vm642, %v1830, %v1807
    %1835 = vrot.lane.b32.xlu0 %v1827, 64
    %v1836 = vpop.permute.xlu0 %1835
    %v1839 = vsel %vm642, %v1836, %v1725
    %v1840 = vsel %vm642, %v1836, 0.0
    %v1842 = vsel %vm171, %v1839, 0
    %1844 = vmatprep.subr.mxu0 0.0
    %1845 = vmatpush1.msra.mxu0 0.0
    %1846 = vmatprep.subr.mxu0 0.0
    %1847 = vmatpush1.msra.mxu0 0.0
    %1848 = vmatprep.subr.mxu0 0.0
    %1849 = vmatpush1.msra.mxu0 0.0
    %1850 = vmatprep.subr.mxu0 0.0
    %1851 = vmatpush1.msra.mxu0 0.0
    %1852 = vmatprep.subr.mxu0 0.0
    %1853 = vmatpush1.msra.mxu0 0.0
    %1854 = vmatprep.subr.mxu0 0.0
    %1855 = vmatpush1.msra.mxu0 0.0
    %1856 = vmatprep.subr.mxu0 0.0
    %1857 = vmatpush1.msra.mxu0 0.0
    %1858 = vmatprep.subr.mxu0 0.0
    %1859 = vmatpush1.msra.mxu0 0.0
    %1860 = vmatprep.subr.mxu0 0.0
    %1861 = vmatpush1.msra.mxu0 0.0
    %1862 = vmatprep.subr.mxu0 0.0
    %1863 = vmatpush1.msra.mxu0 0.0
    %1864 = vmatprep.subr.mxu0 0.0
    %1865 = vmatpush1.msra.mxu0 0.0
    %1866 = vmatprep.subr.mxu0 0.0
    %1867 = vmatpush1.msra.mxu0 0.0
    %1868 = vmatprep.subr.mxu0 0.0
    %1869 = vmatpush1.msra.mxu0 %v51
    %1870 = vmatprep.subr.mxu0 0.0
    %1871 = vmatpush1.msra.mxu0 %v50
    %1872 = vmatprep.subr.mxu0 0.0
    %1873 = vmatpush1.msra.mxu0 %v49
    %1874 = vmatprep.subr.mxu0 0.0
    %1875 = vmatpush1.msra.mxu0 %v48
    %1876 = vmatprep.subr.mxu0 0.0
    %1877 = vmatpush2.msra.mxu0 0.0
    %1878 = vmatprep.subr.mxu0 0.0
    %1879 = vmatpush2.msra.mxu0 0.0
    %1880 = vmatprep.subr.mxu0 0.0
    %1881 = vmatpush2.msra.mxu0 0.0
    %1882 = vmatprep.subr.mxu0 0.0
    %1883 = vmatpush2.msra.mxu0 0.0
    %1884 = vmatprep.subr.mxu0 0.0
    %1885 = vmatpush2.msra.mxu0 0.0
    %1886 = vmatprep.subr.mxu0 0.0
    %1887 = vmatpush2.msra.mxu0 0.0
    %1888 = vmatprep.subr.mxu0 0.0
    %1889 = vmatpush2.msra.mxu0 0.0
    %1890 = vmatprep.subr.mxu0 0.0
    %1891 = vmatpush2.msra.mxu0 0.0
    %1892 = vmatprep.subr.mxu0 0.0
    %1893 = vmatpush2.msra.mxu0 0.0
    %1894 = vmatprep.subr.mxu0 0.0
    %1895 = vmatpush2.msra.mxu0 0.0
    %1896 = vmatprep.subr.mxu0 0.0
    %1897 = vmatpush2.msra.mxu0 0.0
    %1898 = vmatprep.subr.mxu0 0.0
    %1899 = vmatpush2.msra.mxu0 0.0
    %1900 = vmatprep.subr.mxu0 0.0
    %1901 = vmatpush2.msra.mxu0 0.0
    %1902 = vmatprep.subr.mxu0 0.0
    %1903 = vmatpush2.msra.mxu0 0.0
    %1904 = vmatprep.subr.mxu0 0.0
    %1905 = vmatpush2.msra.mxu0 0.0
    %1906 = vmatprep.subr.mxu0 0.0
    %1907 = vmatpush2.msra.mxu0 0.0
    %1908 = vmatprep.mubr.f32.mxu0 0.0
    %1909 = vmatmul.mubr.f32.gmra.mxu0 %v1842
    %v1910 = vpop.f32.mrf.mxu0
    %v1911 = vadd.f32 0.0, %v1910
    %v1912 = vpop.f32.mrf.mxu0
    %1913 = vdwg.mxu0
    %v1915 = vrot.slane %v1911, 6
    %v1917 = vadd.f32 %v1254, %v1915
    %v1918 = vxor.u32 %v1917, 2147483648
    %v1919 = vmul.f32 %v1918, 1.442695
    %v1920 = vpow.pop %v1919
    %v1921 = vadd.f32 %v1920, 1.0
    %v1922 = vrcp.pop %v1921
    %v1923 = vmul.f32 1.0, %v1922
    %v1924 = vtanh.pop %v1917
    %v1926 = vrot.slane %v1833, 6
    %1927 = vrot.lane.b32.xlu0 %v1926, 32
    %v1928 = vpop.permute.xlu0 %1927
    %v1930 = vmul.f32 %v1923, %v1928
    %1932 = vrot.lane.b32.xlu0 %v1924, 32
    %v1933 = vpop.permute.xlu0 %1932
    %v1935 = vmul.f32 %v1923, %v1933
    %1937 = vrot.lane.b32.xlu0 %v1935, 32
    %v1938 = vpop.permute.xlu0 %1937
    %v1940 = vadd.f32 %v1930, %v1938
    %v1941 = vtanh.pop %v1940
    %1943 = vrot.lane.b32.xlu0 %v1941, 32
    %v1944 = vpop.permute.xlu0 %1943
    %v1946 = vmul.f32 %v1923, %v1944
    %1948 = vrot.lane.b32.xlu0 %v1940, 96
    %v1949 = vpop.permute.xlu0 %1948
    %v1952 = vsel %vm642, %v1949, %v1926
    %1954 = vrot.lane.b32.xlu0 %v1946, 64
    %v1955 = vpop.permute.xlu0 %1954
    %v1957 = vrot.slane %v1839, 6
    %v1959 = vsel %vm642, %v1955, %v1957
    %v1960 = vsel %vm642, %v1955, 0.0
    %v1962 = vrot.slane %v1959, 2
    %v1963 = vsel %vm171, %v1962, 0
    %1965 = vmatprep.subr.mxu0 0.0
    %1966 = vmatpush1.msra.mxu0 0.0
    %1967 = vmatprep.subr.mxu0 0.0
    %1968 = vmatpush1.msra.mxu0 0.0
    %1969 = vmatprep.subr.mxu0 0.0
    %1970 = vmatpush1.msra.mxu0 0.0
    %1971 = vmatprep.subr.mxu0 0.0
    %1972 = vmatpush1.msra.mxu0 0.0
    %1973 = vmatprep.subr.mxu0 0.0
    %1974 = vmatpush1.msra.mxu0 0.0
    %1975 = vmatprep.subr.mxu0 0.0
    %1976 = vmatpush1.msra.mxu0 0.0
    %1977 = vmatprep.subr.mxu0 0.0
    %1978 = vmatpush1.msra.mxu0 0.0
    %1979 = vmatprep.subr.mxu0 0.0
    %1980 = vmatpush1.msra.mxu0 0.0
    %1981 = vmatprep.subr.mxu0 0.0
    %1982 = vmatpush1.msra.mxu0 0.0
    %1983 = vmatprep.subr.mxu0 0.0
    %1984 = vmatpush1.msra.mxu0 0.0
    %1985 = vmatprep.subr.mxu0 0.0
    %1986 = vmatpush1.msra.mxu0 0.0
    %1987 = vmatprep.subr.mxu0 0.0
    %1988 = vmatpush1.msra.mxu0 0.0
    %1989 = vmatprep.subr.mxu0 0.0
    %1990 = vmatpush1.msra.mxu0 %v51
    %1991 = vmatprep.subr.mxu0 0.0
    %1992 = vmatpush1.msra.mxu0 %v50
    %1993 = vmatprep.subr.mxu0 0.0
    %1994 = vmatpush1.msra.mxu0 %v49
    %1995 = vmatprep.subr.mxu0 0.0
    %1996 = vmatpush1.msra.mxu0 %v48
    %1997 = vmatprep.subr.mxu0 0.0
    %1998 = vmatpush2.msra.mxu0 0.0
    %1999 = vmatprep.subr.mxu0 0.0
    %2000 = vmatpush2.msra.mxu0 0.0
    %2001 = vmatprep.subr.mxu0 0.0
    %2002 = vmatpush2.msra.mxu0 0.0
    %2003 = vmatprep.subr.mxu0 0.0
    %2004 = vmatpush2.msra.mxu0 0.0
    %2005 = vmatprep.subr.mxu0 0.0
    %2006 = vmatpush2.msra.mxu0 0.0
    %2007 = vmatprep.subr.mxu0 0.0
    %2008 = vmatpush2.msra.mxu0 0.0
    %2009 = vmatprep.subr.mxu0 0.0
    %2010 = vmatpush2.msra.mxu0 0.0
    %2011 = vmatprep.subr.mxu0 0.0
    %2012 = vmatpush2.msra.mxu0 0.0
    %2013 = vmatprep.subr.mxu0 0.0
    %2014 = vmatpush2.msra.mxu0 0.0
    %2015 = vmatprep.subr.mxu0 0.0
    %2016 = vmatpush2.msra.mxu0 0.0
    %2017 = vmatprep.subr.mxu0 0.0
    %2018 = vmatpush2.msra.mxu0 0.0
    %2019 = vmatprep.subr.mxu0 0.0
    %2020 = vmatpush2.msra.mxu0 0.0
    %2021 = vmatprep.subr.mxu0 0.0
    %2022 = vmatpush2.msra.mxu0 0.0
    %2023 = vmatprep.subr.mxu0 0.0
    %2024 = vmatpush2.msra.mxu0 0.0
    %2025 = vmatprep.subr.mxu0 0.0
    %2026 = vmatpush2.msra.mxu0 0.0
    %2027 = vmatprep.subr.mxu0 0.0
    %2028 = vmatpush2.msra.mxu0 0.0
    %2029 = vmatprep.mubr.f32.mxu0 0.0
    %2030 = vmatmul.mubr.f32.gmra.mxu0 %v1963
    %v2031 = vpop.f32.mrf.mxu0
    %v2032 = vadd.f32 0.0, %v2031
    %v2033 = vpop.f32.mrf.mxu0
    %2034 = vdwg.mxu0
    %v2036 = vrot.slane %v2032, 4
    %v2038 = vadd.f32 %v1254, %v2036
    %v2039 = vxor.u32 %v2038, 2147483648
    %v2040 = vmul.f32 %v2039, 1.442695
    %v2041 = vpow.pop %v2040
    %v2042 = vadd.f32 %v2041, 1.0
    %v2043 = vrcp.pop %v2042
    %v2044 = vmul.f32 1.0, %v2043
    %v2045 = vtanh.pop %v2038
    %v2047 = vrot.slane %v1952, 6
    %2048 = vrot.lane.b32.xlu0 %v2047, 32
    %v2049 = vpop.permute.xlu0 %2048
    %v2051 = vmul.f32 %v2044, %v2049
    %2053 = vrot.lane.b32.xlu0 %v2045, 32
    %v2054 = vpop.permute.xlu0 %2053
    %v2056 = vmul.f32 %v2044, %v2054
    %2058 = vrot.lane.b32.xlu0 %v2056, 32
    %v2059 = vpop.permute.xlu0 %2058
    %v2061 = vadd.f32 %v2051, %v2059
    %v2062 = vtanh.pop %v2061
    %2064 = vrot.lane.b32.xlu0 %v2062, 32
    %v2065 = vpop.permute.xlu0 %2064
    %v2067 = vmul.f32 %v2044, %v2065
    %2069 = vrot.lane.b32.xlu0 %v2061, 96
    %v2070 = vpop.permute.xlu0 %2069
    %v2073 = vsel %vm642, %v2070, %v2047
    %2075 = vrot.lane.b32.xlu0 %v2067, 64
    %v2076 = vpop.permute.xlu0 %2075
    %v2078 = vrot.slane %v1959, 6
    %v2080 = vsel %vm642, %v2076, %v2078
    %v2081 = vsel %vm642, %v2076, 0.0
    %v2083 = vrot.slane %v2080, 4
    %v2084 = vsel %vm171, %v2083, 0
    %2086 = vmatprep.subr.mxu0 0.0
    %2087 = vmatpush1.msra.mxu0 0.0
    %2088 = vmatprep.subr.mxu0 0.0
    %2089 = vmatpush1.msra.mxu0 0.0
    %2090 = vmatprep.subr.mxu0 0.0
    %2091 = vmatpush1.msra.mxu0 0.0
    %2092 = vmatprep.subr.mxu0 0.0
    %2093 = vmatpush1.msra.mxu0 0.0
    %2094 = vmatprep.subr.mxu0 0.0
    %2095 = vmatpush1.msra.mxu0 0.0
    %2096 = vmatprep.subr.mxu0 0.0
    %2097 = vmatpush1.msra.mxu0 0.0
    %2098 = vmatprep.subr.mxu0 0.0
    %2099 = vmatpush1.msra.mxu0 0.0
    %2100 = vmatprep.subr.mxu0 0.0
    %2101 = vmatpush1.msra.mxu0 0.0
    %2102 = vmatprep.subr.mxu0 0.0
    %2103 = vmatpush1.msra.mxu0 0.0
    %2104 = vmatprep.subr.mxu0 0.0
    %2105 = vmatpush1.msra.mxu0 0.0
    %2106 = vmatprep.subr.mxu0 0.0
    %2107 = vmatpush1.msra.mxu0 0.0
    %2108 = vmatprep.subr.mxu0 0.0
    %2109 = vmatpush1.msra.mxu0 0.0
    %2110 = vmatprep.subr.mxu0 0.0
    %2111 = vmatpush1.msra.mxu0 %v51
    %2112 = vmatprep.subr.mxu0 0.0
    %2113 = vmatpush1.msra.mxu0 %v50
    %2114 = vmatprep.subr.mxu0 0.0
    %2115 = vmatpush1.msra.mxu0 %v49
    %2116 = vmatprep.subr.mxu0 0.0
    %2117 = vmatpush1.msra.mxu0 %v48
    %2118 = vmatprep.subr.mxu0 0.0
    %2119 = vmatpush2.msra.mxu0 0.0
    %2120 = vmatprep.subr.mxu0 0.0
    %2121 = vmatpush2.msra.mxu0 0.0
    %2122 = vmatprep.subr.mxu0 0.0
    %2123 = vmatpush2.msra.mxu0 0.0
    %2124 = vmatprep.subr.mxu0 0.0
    %2125 = vmatpush2.msra.mxu0 0.0
    %2126 = vmatprep.subr.mxu0 0.0
    %2127 = vmatpush2.msra.mxu0 0.0
    %2128 = vmatprep.subr.mxu0 0.0
    %2129 = vmatpush2.msra.mxu0 0.0
    %2130 = vmatprep.subr.mxu0 0.0
    %2131 = vmatpush2.msra.mxu0 0.0
    %2132 = vmatprep.subr.mxu0 0.0
    %2133 = vmatpush2.msra.mxu0 0.0
    %2134 = vmatprep.subr.mxu0 0.0
    %2135 = vmatpush2.msra.mxu0 0.0
    %2136 = vmatprep.subr.mxu0 0.0
    %2137 = vmatpush2.msra.mxu0 0.0
    %2138 = vmatprep.subr.mxu0 0.0
    %2139 = vmatpush2.msra.mxu0 0.0
    %2140 = vmatprep.subr.mxu0 0.0
    %2141 = vmatpush2.msra.mxu0 0.0
    %2142 = vmatprep.subr.mxu0 0.0
    %2143 = vmatpush2.msra.mxu0 0.0
    %2144 = vmatprep.subr.mxu0 0.0
    %2145 = vmatpush2.msra.mxu0 0.0
    %2146 = vmatprep.subr.mxu0 0.0
    %2147 = vmatpush2.msra.mxu0 0.0
    %2148 = vmatprep.subr.mxu0 0.0
    %2149 = vmatpush2.msra.mxu0 0.0
    %2150 = vmatprep.mubr.f32.mxu0 0.0
    %2151 = vmatmul.mubr.f32.gmra.mxu0 %v2084
    %v2152 = vpop.f32.mrf.mxu0
    %v2153 = vadd.f32 0.0, %v2152
    %v2154 = vpop.f32.mrf.mxu0
    %2155 = vdwg.mxu0
    %v2157 = vrot.slane %v2153, 2
    %v2159 = vadd.f32 %v1254, %v2157
    %v2160 = vxor.u32 %v2159, 2147483648
    %v2161 = vmul.f32 %v2160, 1.442695
    %v2162 = vpow.pop %v2161
    %v2163 = vadd.f32 %v2162, 1.0
    %v2164 = vrcp.pop %v2163
    %v2165 = vmul.f32 1.0, %v2164
    %v2166 = vtanh.pop %v2159
    %v2168 = vrot.slane %v2073, 6
    %2169 = vrot.lane.b32.xlu0 %v2168, 32
    %v2170 = vpop.permute.xlu0 %2169
    %v2172 = vmul.f32 %v2165, %v2170
    %2174 = vrot.lane.b32.xlu0 %v2166, 32
    %v2175 = vpop.permute.xlu0 %2174
    %v2177 = vmul.f32 %v2165, %v2175
    %2179 = vrot.lane.b32.xlu0 %v2177, 32
    %v2180 = vpop.permute.xlu0 %2179
    %v2182 = vadd.f32 %v2172, %v2180
    %v2183 = vtanh.pop %v2182
    %2185 = vrot.lane.b32.xlu0 %v2183, 32
    %v2186 = vpop.permute.xlu0 %2185
    %v2188 = vmul.f32 %v2165, %v2186
    %2190 = vrot.lane.b32.xlu0 %v2188, 64
    %v2191 = vpop.permute.xlu0 %2190
    %v2193 = vsel %vm642, %v2191, 0.0
    %v2195 = vrot.slane %v1481, 2
    %v2197 = vadd.f32 %v1361, %v2195
    %v2199 = vrot.slane %v1602, 4
    %v2201 = vadd.f32 %v2197, %v2199
    %v2203 = vrot.slane %v1723, 6
    %v2205 = vadd.f32 %v2201, %v2203
    %v2206 = vadd.f32 %v2205, %v1840
    %v2208 = vrot.slane %v1960, 2
    %v2210 = vadd.f32 %v2206, %v2208
    %v2212 = vrot.slane %v2081, 4
    %v2214 = vadd.f32 %v2210, %v2212
    %v2216 = vrot.slane %v2193, 6
    %v2218 = vadd.f32 %v2214, %v2216
    %v2219 = vmul.f32 %v2218, 0.125
    %v2220 = vld [vmem:[%s8] sm:$0xff]
    %v2221 = vld [vmem:[%s8 + $0x8] sm:$0xff]
    %v2222 = vld [vmem:[%s8 + $0x10] sm:$0xff]
    %v2223 = vld [vmem:[%s8 + $0x18] sm:$0xff]
    %v2224 = vld [vmem:[%s9] sm:$0x1]
    %v2226 = vlaneseq
    %v2227 = vshrl.u32 %v2226, 7
    %v2228 = vsub.s32 0, %v2227
    %v2229 = vrot.slane %v2224, %v2228
    %v2232 = vsel %vm171, %v2219, 0
    %2234 = vmatprep.subr.mxu0 0.0
    %2235 = vmatpush1.msra.mxu0 0.0
    %2236 = vmatprep.subr.mxu0 0.0
    %2237 = vmatpush1.msra.mxu0 0.0
    %2238 = vmatprep.subr.mxu0 0.0
    %2239 = vmatpush1.msra.mxu0 0.0
    %2240 = vmatprep.subr.mxu0 0.0
    %2241 = vmatpush1.msra.mxu0 0.0
    %2242 = vmatprep.subr.mxu0 0.0
    %2243 = vmatpush1.msra.mxu0 0.0
    %2244 = vmatprep.subr.mxu0 0.0
    %2245 = vmatpush1.msra.mxu0 0.0
    %2246 = vmatprep.subr.mxu0 0.0
    %2247 = vmatpush1.msra.mxu0 0.0
    %2248 = vmatprep.subr.mxu0 0.0
    %2249 = vmatpush1.msra.mxu0 0.0
    %2250 = vmatprep.subr.mxu0 0.0
    %2251 = vmatpush1.msra.mxu0 0.0
    %2252 = vmatprep.subr.mxu0 0.0
    %2253 = vmatpush1.msra.mxu0 0.0
    %2254 = vmatprep.subr.mxu0 0.0
    %2255 = vmatpush1.msra.mxu0 0.0
    %2256 = vmatprep.subr.mxu0 0.0
    %2257 = vmatpush1.msra.mxu0 0.0
    %2258 = vmatprep.subr.mxu0 0.0
    %2259 = vmatpush1.msra.mxu0 %v2223
    %2260 = vmatprep.subr.mxu0 0.0
    %2261 = vmatpush1.msra.mxu0 %v2222
    %2262 = vmatprep.subr.mxu0 0.0
    %2263 = vmatpush1.msra.mxu0 %v2221
    %2264 = vmatprep.subr.mxu0 0.0
    %2265 = vmatpush1.msra.mxu0 %v2220
    %2266 = vmatprep.subr.mxu0 0.0
    %2267 = vmatpush2.msra.mxu0 0.0
    %2268 = vmatprep.subr.mxu0 0.0
    %2269 = vmatpush2.msra.mxu0 0.0
    %2270 = vmatprep.subr.mxu0 0.0
    %2271 = vmatpush2.msra.mxu0 0.0
    %2272 = vmatprep.subr.mxu0 0.0
    %2273 = vmatpush2.msra.mxu0 0.0
    %2274 = vmatprep.subr.mxu0 0.0
    %2275 = vmatpush2.msra.mxu0 0.0
    %2276 = vmatprep.subr.mxu0 0.0
    %2277 = vmatpush2.msra.mxu0 0.0
    %2278 = vmatprep.subr.mxu0 0.0
    %2279 = vmatpush2.msra.mxu0 0.0
    %2280 = vmatprep.subr.mxu0 0.0
    %2281 = vmatpush2.msra.mxu0 0.0
    %2282 = vmatprep.subr.mxu0 0.0
    %2283 = vmatpush2.msra.mxu0 0.0
    %2284 = vmatprep.subr.mxu0 0.0
    %2285 = vmatpush2.msra.mxu0 0.0
    %2286 = vmatprep.subr.mxu0 0.0
    %2287 = vmatpush2.msra.mxu0 0.0
    %2288 = vmatprep.subr.mxu0 0.0
    %2289 = vmatpush2.msra.mxu0 0.0
    %2290 = vmatprep.subr.mxu0 0.0
    %2291 = vmatpush2.msra.mxu0 0.0
    %2292 = vmatprep.subr.mxu0 0.0
    %2293 = vmatpush2.msra.mxu0 0.0
    %2294 = vmatprep.subr.mxu0 0.0
    %2295 = vmatpush2.msra.mxu0 0.0
    %2296 = vmatprep.subr.mxu0 0.0
    %2297 = vmatpush2.msra.mxu0 0.0
    %2298 = vmatprep.mubr.f32.mxu0 0.0
    %2299 = vmatmul.mubr.f32.gmra.mxu0 %v2232
    %v2300 = vpop.f32.mrf.mxu0
    %v2301 = vadd.f32 %v2229, %v2300
    %v2302 = vpop.f32.mrf.mxu0
    %2303 = vdwg.mxu0
    %v2304 = vmax.f32 %v2301, 0.0
    %v2305 = vld [vmem:[%s10] sm:$0xff]
    %v2306 = vld [vmem:[%s10 + $0x8] sm:$0xff]
    %v2307 = vld [vmem:[%s10 + $0x10] sm:$0xff]
    %v2308 = vld [vmem:[%s10 + $0x18] sm:$0xff]
    %v2309 = vld [vmem:[%s10 + $0x20] sm:$0xff]
    %v2310 = vld [vmem:[%s10 + $0x28] sm:$0xff]
    %v2311 = vld [vmem:[%s10 + $0x30] sm:$0xff]
    %v2312 = vld [vmem:[%s10 + $0x38] sm:$0xff]
    %v2313 = vld [vmem:[%s11] sm:$0x1]
    %v2315 = vlaneseq
    %v2316 = vshrl.u32 %v2315, 7
    %v2317 = vsub.s32 0, %v2316
    %v2318 = vrot.slane %v2313, %v2317
    %v2321 = vsel %vm88, %v2304, 0
    %2323 = vmatprep.subr.mxu0 0.0
    %2324 = vmatpush1.msra.mxu0 0.0
    %2325 = vmatprep.subr.mxu0 0.0
    %2326 = vmatpush1.msra.mxu0 0.0
    %2327 = vmatprep.subr.mxu0 0.0
    %2328 = vmatpush1.msra.mxu0 0.0
    %2329 = vmatprep.subr.mxu0 0.0
    %2330 = vmatpush1.msra.mxu0 0.0
    %2331 = vmatprep.subr.mxu0 0.0
    %2332 = vmatpush1.msra.mxu0 0.0
    %2333 = vmatprep.subr.mxu0 0.0
    %2334 = vmatpush1.msra.mxu0 0.0
    %2335 = vmatprep.subr.mxu0 0.0
    %2336 = vmatpush1.msra.mxu0 0.0
    %2337 = vmatprep.subr.mxu0 0.0
    %2338 = vmatpush1.msra.mxu0 0.0
    %2339 = vmatprep.subr.mxu0 0.0
    %2340 = vmatpush1.msra.mxu0 %v2312
    %2341 = vmatprep.subr.mxu0 0.0
    %2342 = vmatpush1.msra.mxu0 %v2311
    %2343 = vmatprep.subr.mxu0 0.0
    %2344 = vmatpush1.msra.mxu0 %v2310
    %2345 = vmatprep.subr.mxu0 0.0
    %2346 = vmatpush1.msra.mxu0 %v2309
    %2347 = vmatprep.subr.mxu0 0.0
    %2348 = vmatpush1.msra.mxu0 %v2308
    %2349 = vmatprep.subr.mxu0 0.0
    %2350 = vmatpush1.msra.mxu0 %v2307
    %2351 = vmatprep.subr.mxu0 0.0
    %2352 = vmatpush1.msra.mxu0 %v2306
    %2353 = vmatprep.subr.mxu0 0.0
    %2354 = vmatpush1.msra.mxu0 %v2305
    %2355 = vmatprep.subr.mxu0 0.0
    %2356 = vmatpush2.msra.mxu0 0.0
    %2357 = vmatprep.subr.mxu0 0.0
    %2358 = vmatpush2.msra.mxu0 0.0
    %2359 = vmatprep.subr.mxu0 0.0
    %2360 = vmatpush2.msra.mxu0 0.0
    %2361 = vmatprep.subr.mxu0 0.0
    %2362 = vmatpush2.msra.mxu0 0.0
    %2363 = vmatprep.subr.mxu0 0.0
    %2364 = vmatpush2.msra.mxu0 0.0
    %2365 = vmatprep.subr.mxu0 0.0
    %2366 = vmatpush2.msra.mxu0 0.0
    %2367 = vmatprep.subr.mxu0 0.0
    %2368 = vmatpush2.msra.mxu0 0.0
    %2369 = vmatprep.subr.mxu0 0.0
    %2370 = vmatpush2.msra.mxu0 0.0
    %2371 = vmatprep.subr.mxu0 0.0
    %2372 = vmatpush2.msra.mxu0 0.0
    %2373 = vmatprep.subr.mxu0 0.0
    %2374 = vmatpush2.msra.mxu0 0.0
    %2375 = vmatprep.subr.mxu0 0.0
    %2376 = vmatpush2.msra.mxu0 0.0
    %2377 = vmatprep.subr.mxu0 0.0
    %2378 = vmatpush2.msra.mxu0 0.0
    %2379 = vmatprep.subr.mxu0 0.0
    %2380 = vmatpush2.msra.mxu0 0.0
    %2381 = vmatprep.subr.mxu0 0.0
    %2382 = vmatpush2.msra.mxu0 0.0
    %2383 = vmatprep.subr.mxu0 0.0
    %2384 = vmatpush2.msra.mxu0 0.0
    %2385 = vmatprep.subr.mxu0 0.0
    %2386 = vmatpush2.msra.mxu0 0.0
    %2387 = vmatprep.mubr.f32.mxu0 0.0
    %2388 = vmatmul.mubr.f32.gmra.mxu0 %v2321
    %v2389 = vpop.f32.mrf.mxu0
    %v2390 = vadd.f32 %v2318, %v2389
    %v2391 = vpop.f32.mrf.mxu0
    %2392 = vdwg.mxu0
    %vm2393 = vcmask 25600
    %2394 = vst.msk [vmem:[#allocation2] sm:$0x3] %vm2393, %v2390
    // Predicated region
    $region50: #{text_based_forward.1} parent=1 // pred_check
      _
    $region51: #{text_based_forward.1} parent=1 // pred_check_branch
      %2396 = sbr.rel (0) target = $region53
    $region52: #{text_based_forward.1} parent=1 // pred_region
      %s2398 = ssub.s32 32, 32
      %2399 = vsyncadd [#allocation3], %s2398
      %s2401 = sshll.u32 [#allocation2], 4
      %s2402 = int_to_ptr.vmem [resolvable:$true] %s2401
      %2404 = dma.vmem_to_hbm [thread:$0]  %s2402, 32, %s12, [#allocation3]
    $region53: #{text_based_forward.1} parent=1 // pred_fallthru
      _
    // Predicated region
    $region54: #{text_based_forward.1} parent=1 // pred_check
      _
    $region55: #{text_based_forward.1} parent=1 // pred_check_branch
      %2406 = sbr.rel (0) target = $region57
    $region56: #{text_based_forward.1} parent=1 // pred_region
      %2407 = dma.done [#allocation3], 32
    $region57: #{text_based_forward.1} parent=1 // pred_fallthru
      _
    %2408 = vsyncpa [#allocation3], 1

</llo_original>
